<compile_context>
chip_gen: v6e
topology: v6e:2x2x1
jax: 0.10.0
libtpu: 0.0.40
codegen_flags: <defaults>
</compile_context>

<pallas_src>
import functools

import jax
import jax.numpy as jnp
from jax.experimental import pallas as pl
from jax.experimental.pallas import tpu as pltpu


def _actor_kernel(x_ref,
                  w1_ref, p1_ref,
                  w2_ref, p2_ref,
                  w3_ref, b3_ref,
                  o_ref):
    eps = 1e-5

    def linear_ln_relu(h_in, w_ref, p_ref):
        # x @ W on the MXU, f32 accumulation.  p_ref rows: 0=bias, 1=gamma, 2=beta.
        h = jnp.dot(h_in, w_ref[...], preferred_element_type=jnp.float32)
        z = h + p_ref[0:1, :]                                   # bias add (f32, VPU)
        m = jnp.mean(z, axis=-1, keepdims=True)                 # two independent
        m2 = jnp.mean(z * z, axis=-1, keepdims=True)            # XLU reductions
        var = m2 - m * m                                        # E[z^2] - E[z]^2
        h = (z - m) * jax.lax.rsqrt(var + eps) * p_ref[1:2, :] + p_ref[2:3, :]
        return jnp.maximum(h, 0.0)

    # x_ref is already in the weight dtype (pre-cast in the wrapper).
    h = linear_ln_relu(x_ref[...], w1_ref, p1_ref)
    h = linear_ln_relu(h.astype(w2_ref.dtype), w2_ref, p2_ref)

    # mu head (narrow N = out_dim) + tanh; stored narrow (no lane padding in HBM).
    y = jnp.dot(h.astype(w3_ref.dtype), w3_ref[...],
                preferred_element_type=jnp.float32) + b3_ref[...]
    o_ref[...] = jnp.tanh(y).astype(o_ref.dtype)


def _cdiv(a, b):
    return -(-a // b)


def _round_up(n, m):
    return ((n + m - 1) // m) * m


@functools.partial(
    jax.jit, static_argnames=("max_block_b", "min_grid_steps", "weight_dtype"))
def feed_forward_actor(x, params, max_block_b=1024, min_grid_steps=2,
                       weight_dtype=jnp.bfloat16):
    """x: [B, in_dim] float32.  params: dict of weights (see init_params).

    max_block_b:    cap on the batch tile (sweep 512/1024/2048/4096; VMEM stays
                    a few MiB even at 4096).
    min_grid_steps: lower bound on grid steps (2 keeps both v7x TCs busy).
    weight_dtype:   jnp.bfloat16 (native MXU path, default) or jnp.float32 (exact);
                    LayerNorm / tanh math stays f32 either way.
    """
    B, in_dim = x.shape
    hidden = params["w1"].shape[1]
    out_dim = params["w3"].shape[1]

    # Adaptive tiling: >= min_grid_steps steps, tile <= max_block_b, rows padded
    # only to a multiple of 16 (covers both f32 and bf16 sublane packing).
    n_steps = max(min_grid_steps, _cdiv(B, max_block_b))
    block_b = _round_up(_cdiv(B, n_steps), 16)
    B_pad = block_b * n_steps

    x_p = x.astype(weight_dtype)                 # pre-cast: halves x DMA for bf16
    if B_pad != B:
        x_p = jnp.pad(x_p, ((0, B_pad - B), (0, 0)))

    # Pack (bias, gamma, beta) per LayerNorm'd layer into one (3, hidden) array.
    def pack(b, g, be):
        return jnp.concatenate([b, g, be], axis=0).astype(jnp.float32)

    p1 = pack(params["b1"], params["g1"], params["be1"])
    p2 = pack(params["b2"], params["g2"], params["be2"])

    w1 = params["w1"].astype(weight_dtype)
    w2 = params["w2"].astype(weight_dtype)
    w3 = params["w3"].astype(weight_dtype)       # narrow (hidden, out_dim)
    b3 = params["b3"].astype(jnp.float32)        # narrow (1, out_dim)

    grid = (n_steps,)

    def rep(shape):
        # Full-extent (grid-invariant) block for the small parameter arrays.
        return pl.BlockSpec(shape, lambda i: (0, 0))

    out = pl.pallas_call(
        _actor_kernel,
        out_shape=jax.ShapeDtypeStruct((B_pad, out_dim), jnp.float32),
        grid_spec=pl.GridSpec(
            grid=grid,
            in_specs=[
                pl.BlockSpec((block_b, in_dim), lambda i: (i, 0)),  # x
                rep((in_dim, hidden)),    # w1
                rep((3, hidden)),         # b1, gamma1, beta1
                rep((hidden, hidden)),    # w2
                rep((3, hidden)),         # b2, gamma2, beta2
                rep((hidden, out_dim)),   # w3 (narrow — last dim == full dim)
                rep((1, out_dim)),        # b3
            ],
            out_specs=pl.BlockSpec((block_b, out_dim), lambda i: (i, 0)),
        ),
        compiler_params=pltpu.CompilerParams(
            dimension_semantics=("parallel",),   # megacore / v7x dual-TC sharding
        ),
    )(x_p, w1, p1, w2, p2, w3, b3)

    return out[:B, :]


def init_params(key, in_dim, out_dim, hidden_dim=128):
    """Deterministic init mimicking PyTorch defaults:
    Linear: U(-1/sqrt(fan_in), 1/sqrt(fan_in)) for W and b.
    LayerNorm: gamma=1, beta=0."""
    ks = jax.random.split(key, 6)

    def linear(kw, kb, fan_in, fan_out):
        bound = 1.0 / jnp.sqrt(fan_in)
        w = jax.random.uniform(kw, (fan_in, fan_out), jnp.float32, -bound, bound)
        b = jax.random.uniform(kb, (1, fan_out), jnp.float32, -bound, bound)
        return w, b

    w1, b1 = linear(ks[0], ks[1], in_dim, hidden_dim)
    w2, b2 = linear(ks[2], ks[3], hidden_dim, hidden_dim)
    w3, b3 = linear(ks[4], ks[5], hidden_dim, out_dim)

    return {
        "w1": w1, "b1": b1,
        "g1": jnp.ones((1, hidden_dim), jnp.float32),
        "be1": jnp.zeros((1, hidden_dim), jnp.float32),
        "w2": w2, "b2": b2,
        "g2": jnp.ones((1, hidden_dim), jnp.float32),
        "be2": jnp.zeros((1, hidden_dim), jnp.float32),
        "w3": w3, "b3": b3,
    }


def _reference(x, p):
    """Pure-JAX reference (same math as the PyTorch forward)."""
    def ln(h, g, b):
        m = jnp.mean(h, axis=-1, keepdims=True)
        v = jnp.mean((h - m) ** 2, axis=-1, keepdims=True)
        return (h - m) / jnp.sqrt(v + 1e-5) * g + b

    h = jax.nn.relu(ln(x @ p["w1"] + p["b1"], p["g1"], p["be1"]))
    h = jax.nn.relu(ln(h @ p["w2"] + p["b2"], p["g2"], p["be2"]))
    return jnp.tanh(h @ p["w3"] + p["b3"])


if __name__ == "__main__":
    key = jax.random.PRNGKey(0)
    k_x, k_p = jax.random.split(key)

    # Small shapes; B is deliberately NOT a multiple of the tile size to exercise
    # the adaptive padding path (B=300 -> block_b=160, 2 grid steps, B_pad=320).
    B, in_dim, hidden_dim, out_dim = 300, 16, 128, 4
    x = jax.random.normal(k_x, (B, in_dim), jnp.float32)
    params = init_params(k_p, in_dim, out_dim, hidden_dim)

    ref = _reference(x, params)

    # Default (bf16 weights/activations for the matmuls, f32 LN/tanh).
    out_bf16 = jax.block_until_ready(feed_forward_actor(x, params))
    assert out_bf16.shape == (B, out_dim)
    assert jnp.allclose(out_bf16, ref, atol=5e-2, rtol=5e-2), "bf16 mismatch vs reference"

    # f32 weights: exact path.
    out_f32 = jax.block_until_ready(
        feed_forward_actor(x, params, weight_dtype=jnp.float32))
    assert out_f32.shape == (B, out_dim)
    assert jnp.allclose(out_f32, ref, atol=2e-4, rtol=2e-4), "f32 mismatch vs reference"

    print("KERNEL_OK")
</pallas_src>

<mosaic_0001>
module attributes {stable_mosaic.version = 11 : i64} {
  func.func @_actor_kernel(%arg0: i32, %arg1: memref<160x16xbf16, #tpu.memory_space<vmem>>, %arg2: memref<16x128xbf16, #tpu.memory_space<vmem>>, %arg3: memref<3x128xf32, #tpu.memory_space<vmem>>, %arg4: memref<128x128xbf16, #tpu.memory_space<vmem>>, %arg5: memref<3x128xf32, #tpu.memory_space<vmem>>, %arg6: memref<128x4xbf16, #tpu.memory_space<vmem>>, %arg7: memref<1x4xf32, #tpu.memory_space<vmem>>, %arg8: memref<160x4xf32, #tpu.memory_space<vmem>>) attributes {dimension_semantics = [#tpu.dimension_semantics<parallel>], iteration_bounds = array<i64: 2>, scalar_prefetch = 0 : i64, scratch_operands = 0 : i64, tpu.core_type = #tpu.core_type<tc>, window_params = [{transform_indices = @transform_0, window_bounds = array<i64: 160, 16>}, {pipeline_mode = #tpu.pipeline_mode<synchronous>, transform_indices = @transform_1, window_bounds = array<i64: 16, 128>}, {pipeline_mode = #tpu.pipeline_mode<synchronous>, transform_indices = @transform_2, window_bounds = array<i64: 3, 128>}, {pipeline_mode = #tpu.pipeline_mode<synchronous>, transform_indices = @transform_3, window_bounds = array<i64: 128, 128>}, {pipeline_mode = #tpu.pipeline_mode<synchronous>, transform_indices = @transform_4, window_bounds = array<i64: 3, 128>}, {pipeline_mode = #tpu.pipeline_mode<synchronous>, transform_indices = @transform_5, window_bounds = array<i64: 128, 4>}, {pipeline_mode = #tpu.pipeline_mode<synchronous>, transform_indices = @transform_6, window_bounds = array<i64: 1, 4>}, {transform_indices = @transform_7, window_bounds = array<i64: 160, 4>}]} {
    %c0 = arith.constant 0 : index
    %c0_0 = arith.constant 0 : index
    %0 = vector.load %arg1[%c0, %c0_0] : memref<160x16xbf16, #tpu.memory_space<vmem>>, vector<160x16xbf16>
    %c0_1 = arith.constant 0 : index
    %c0_2 = arith.constant 0 : index
    %1 = vector.load %arg2[%c0_1, %c0_2] : memref<16x128xbf16, #tpu.memory_space<vmem>>, vector<16x128xbf16>
    %cst = arith.constant dense<0.000000e+00> : vector<160x128xf32>
    %2 = tpu.matmul %0, %1, %cst {dimension_numbers = #tpu.dot_dimension_numbers<[1], [0], [0], [1], [0, 0, 1, 1], [], []>} : vector<160x16xbf16>, vector<16x128xbf16>, vector<160x128xf32> -> vector<160x128xf32>
    %c0_3 = arith.constant 0 : index
    %c0_4 = arith.constant 0 : index
    %3 = vector.load %arg3[%c0_3, %c0_4] : memref<3x128xf32, #tpu.memory_space<vmem>>, vector<1x128xf32>
    %4 = vector.broadcast %3 : vector<1x128xf32> to vector<160x128xf32>
    %5 = arith.addf %2, %4 : vector<160x128xf32>
    %cst_5 = arith.constant dense<0.000000e+00> : vector<160xf32>
    %6 = vector.multi_reduction <add>, %5, %cst_5 [1] : vector<160x128xf32> to vector<160xf32>
    %7 = vector.shape_cast %6 : vector<160xf32> to vector<160x1xf32>
    %cst_6 = arith.constant 1.280000e+02 : f32
    %8 = vector.broadcast %cst_6 : f32 to vector<160x1xf32>
    %9 = arith.divf %7, %8 : vector<160x1xf32>
    %10 = arith.mulf %5, %5 : vector<160x128xf32>
    %cst_7 = arith.constant dense<0.000000e+00> : vector<160xf32>
    %11 = vector.multi_reduction <add>, %10, %cst_7 [1] : vector<160x128xf32> to vector<160xf32>
    %12 = vector.shape_cast %11 : vector<160xf32> to vector<160x1xf32>
    %cst_8 = arith.constant 1.280000e+02 : f32
    %13 = vector.broadcast %cst_8 : f32 to vector<160x1xf32>
    %14 = arith.divf %12, %13 : vector<160x1xf32>
    %15 = arith.mulf %9, %9 : vector<160x1xf32>
    %16 = arith.subf %14, %15 : vector<160x1xf32>
    %17 = vector.broadcast %9 : vector<160x1xf32> to vector<160x128xf32>
    %18 = arith.subf %5, %17 : vector<160x128xf32>
    %cst_9 = arith.constant 9.99999974E-6 : f32
    %19 = vector.broadcast %cst_9 : f32 to vector<160x1xf32>
    %20 = arith.addf %16, %19 : vector<160x1xf32>
    %21 = math.rsqrt %20 : vector<160x1xf32>
    %22 = vector.broadcast %21 : vector<160x1xf32> to vector<160x128xf32>
    %23 = arith.mulf %18, %22 : vector<160x128xf32>
    %c1 = arith.constant 1 : index
    %c0_10 = arith.constant 0 : index
    %24 = vector.load %arg3[%c1, %c0_10] : memref<3x128xf32, #tpu.memory_space<vmem>>, vector<1x128xf32>
    %25 = vector.broadcast %24 : vector<1x128xf32> to vector<160x128xf32>
    %26 = arith.mulf %23, %25 : vector<160x128xf32>
    %c2 = arith.constant 2 : index
    %c0_11 = arith.constant 0 : index
    %27 = vector.load %arg3[%c2, %c0_11] : memref<3x128xf32, #tpu.memory_space<vmem>>, vector<1x128xf32>
    %28 = vector.broadcast %27 : vector<1x128xf32> to vector<160x128xf32>
    %29 = arith.addf %26, %28 : vector<160x128xf32>
    %cst_12 = arith.constant 0.000000e+00 : f32
    %30 = vector.broadcast %cst_12 : f32 to vector<160x128xf32>
    %31 = arith.maximumf %29, %30 : vector<160x128xf32>
    %32 = arith.truncf %31 : vector<160x128xf32> to vector<160x128xbf16>
    %c0_13 = arith.constant 0 : index
    %c0_14 = arith.constant 0 : index
    %33 = vector.load %arg4[%c0_13, %c0_14] : memref<128x128xbf16, #tpu.memory_space<vmem>>, vector<128x128xbf16>
    %cst_15 = arith.constant dense<0.000000e+00> : vector<160x128xf32>
    %34 = tpu.matmul %32, %33, %cst_15 {dimension_numbers = #tpu.dot_dimension_numbers<[1], [0], [0], [1], [0, 0, 1, 1], [], []>} : vector<160x128xbf16>, vector<128x128xbf16>, vector<160x128xf32> -> vector<160x128xf32>
    %c0_16 = arith.constant 0 : index
    %c0_17 = arith.constant 0 : index
    %35 = vector.load %arg5[%c0_16, %c0_17] : memref<3x128xf32, #tpu.memory_space<vmem>>, vector<1x128xf32>
    %36 = vector.broadcast %35 : vector<1x128xf32> to vector<160x128xf32>
    %37 = arith.addf %34, %36 : vector<160x128xf32>
    %cst_18 = arith.constant dense<0.000000e+00> : vector<160xf32>
    %38 = vector.multi_reduction <add>, %37, %cst_18 [1] : vector<160x128xf32> to vector<160xf32>
    %39 = vector.shape_cast %38 : vector<160xf32> to vector<160x1xf32>
    %cst_19 = arith.constant 1.280000e+02 : f32
    %40 = vector.broadcast %cst_19 : f32 to vector<160x1xf32>
    %41 = arith.divf %39, %40 : vector<160x1xf32>
    %42 = arith.mulf %37, %37 : vector<160x128xf32>
    %cst_20 = arith.constant dense<0.000000e+00> : vector<160xf32>
    %43 = vector.multi_reduction <add>, %42, %cst_20 [1] : vector<160x128xf32> to vector<160xf32>
    %44 = vector.shape_cast %43 : vector<160xf32> to vector<160x1xf32>
    %cst_21 = arith.constant 1.280000e+02 : f32
    %45 = vector.broadcast %cst_21 : f32 to vector<160x1xf32>
    %46 = arith.divf %44, %45 : vector<160x1xf32>
    %47 = arith.mulf %41, %41 : vector<160x1xf32>
    %48 = arith.subf %46, %47 : vector<160x1xf32>
    %49 = vector.broadcast %41 : vector<160x1xf32> to vector<160x128xf32>
    %50 = arith.subf %37, %49 : vector<160x128xf32>
    %cst_22 = arith.constant 9.99999974E-6 : f32
    %51 = vector.broadcast %cst_22 : f32 to vector<160x1xf32>
    %52 = arith.addf %48, %51 : vector<160x1xf32>
    %53 = math.rsqrt %52 : vector<160x1xf32>
    %54 = vector.broadcast %53 : vector<160x1xf32> to vector<160x128xf32>
    %55 = arith.mulf %50, %54 : vector<160x128xf32>
    %c1_23 = arith.constant 1 : index
    %c0_24 = arith.constant 0 : index
    %56 = vector.load %arg5[%c1_23, %c0_24] : memref<3x128xf32, #tpu.memory_space<vmem>>, vector<1x128xf32>
    %57 = vector.broadcast %56 : vector<1x128xf32> to vector<160x128xf32>
    %58 = arith.mulf %55, %57 : vector<160x128xf32>
    %c2_25 = arith.constant 2 : index
    %c0_26 = arith.constant 0 : index
    %59 = vector.load %arg5[%c2_25, %c0_26] : memref<3x128xf32, #tpu.memory_space<vmem>>, vector<1x128xf32>
    %60 = vector.broadcast %59 : vector<1x128xf32> to vector<160x128xf32>
    %61 = arith.addf %58, %60 : vector<160x128xf32>
    %cst_27 = arith.constant 0.000000e+00 : f32
    %62 = vector.broadcast %cst_27 : f32 to vector<160x128xf32>
    %63 = arith.maximumf %61, %62 : vector<160x128xf32>
    %64 = arith.truncf %63 : vector<160x128xf32> to vector<160x128xbf16>
    %c0_28 = arith.constant 0 : index
    %c0_29 = arith.constant 0 : index
    %65 = vector.load %arg6[%c0_28, %c0_29] : memref<128x4xbf16, #tpu.memory_space<vmem>>, vector<128x4xbf16>
    %cst_30 = arith.constant dense<0.000000e+00> : vector<160x4xf32>
    %66 = tpu.matmul %64, %65, %cst_30 {dimension_numbers = #tpu.dot_dimension_numbers<[1], [0], [0], [1], [0, 0, 1, 1], [], []>} : vector<160x128xbf16>, vector<128x4xbf16>, vector<160x4xf32> -> vector<160x4xf32>
    %c0_31 = arith.constant 0 : index
    %c0_32 = arith.constant 0 : index
    %67 = vector.load %arg7[%c0_31, %c0_32] : memref<1x4xf32, #tpu.memory_space<vmem>>, vector<1x4xf32>
    %68 = vector.broadcast %67 : vector<1x4xf32> to vector<160x4xf32>
    %69 = arith.addf %66, %68 : vector<160x4xf32>
    %70 = math.tanh %69 : vector<160x4xf32>
    %c0_33 = arith.constant 0 : index
    %c0_34 = arith.constant 0 : index
    %71 = vector.load %arg8[%c0_33, %c0_34] : memref<160x4xf32, #tpu.memory_space<vmem>>, vector<160x4xf32>
    tpu.vector_store %arg8[%c0_33, %c0_34], %70 {strides = array<i32>} : memref<160x4xf32, #tpu.memory_space<vmem>>, vector<160x4xf32>,
    return
  }
  func.func @transform_0(%arg0: i32) -> (i32, i32) {
    %c0_i32 = arith.constant 0 : i32
    %c0_i32_0 = arith.constant 0 : i32
    return %arg0, %c0_i32 : i32, i32
  }
  func.func @transform_1(%arg0: i32) -> (i32, i32) {
    %c0_i32 = arith.constant 0 : i32
    %c0_i32_0 = arith.constant 0 : i32
    %c0_i32_1 = arith.constant 0 : i32
    return %c0_i32, %c0_i32_0 : i32, i32
  }
  func.func @transform_2(%arg0: i32) -> (i32, i32) {
    %c0_i32 = arith.constant 0 : i32
    %c0_i32_0 = arith.constant 0 : i32
    %c0_i32_1 = arith.constant 0 : i32
    return %c0_i32, %c0_i32_0 : i32, i32
  }
  func.func @transform_3(%arg0: i32) -> (i32, i32) {
    %c0_i32 = arith.constant 0 : i32
    %c0_i32_0 = arith.constant 0 : i32
    %c0_i32_1 = arith.constant 0 : i32
    return %c0_i32, %c0_i32_0 : i32, i32
  }
  func.func @transform_4(%arg0: i32) -> (i32, i32) {
    %c0_i32 = arith.constant 0 : i32
    %c0_i32_0 = arith.constant 0 : i32
    %c0_i32_1 = arith.constant 0 : i32
    return %c0_i32, %c0_i32_0 : i32, i32
  }
  func.func @transform_5(%arg0: i32) -> (i32, i32) {
    %c0_i32 = arith.constant 0 : i32
    %c0_i32_0 = arith.constant 0 : i32
    %c0_i32_1 = arith.constant 0 : i32
    return %c0_i32, %c0_i32_0 : i32, i32
  }
  func.func @transform_6(%arg0: i32) -> (i32, i32) {
    %c0_i32 = arith.constant 0 : i32
    %c0_i32_0 = arith.constant 0 : i32
    %c0_i32_1 = arith.constant 0 : i32
    return %c0_i32, %c0_i32_0 : i32, i32
  }
  func.func @transform_7(%arg0: i32) -> (i32, i32) {
    %c0_i32 = arith.constant 0 : i32
    %c0_i32_0 = arith.constant 0 : i32
    return %arg0, %c0_i32 : i32, i32
  }
}

</mosaic_0001>

<llo_original>
// kernel: feed_forward_actor.1
$region0: #{feed_forward_actor.1}
  #allocation0 [shape = 'u32[]', space=smem, size = 0x4, offset = 0x4, fixed_abs, tag = 'smem constant byte address 0x4 - core index']
  #allocation1 [shape = 'u32[144,128]{1,0:T(1,128)}', space=vmem, size = 0x12000, scoped, tag = 'internal scratch']
  %s0 = inlined_call_operand.vmem [shape: bf16[320,16], index: 0, kind: input, shape index: {}]
  %s1 = inlined_call_operand.vmem [shape: bf16[16,128], index: 1, kind: input, shape index: {}]
  %s2 = inlined_call_operand.vmem [shape: f32[3,128], index: 2, kind: input, shape index: {}]
  %s3 = inlined_call_operand.vmem [shape: bf16[128,128], index: 3, kind: input, shape index: {}]
  %s4 = inlined_call_operand.vmem [shape: f32[3,128], index: 4, kind: input, shape index: {}]
  %s5 = inlined_call_operand.vmem [shape: bf16[128,4], index: 5, kind: input, shape index: {}]
  %s6 = inlined_call_operand.vmem [shape: f32[1,4], index: 6, kind: input, shape index: {}]
  %s7 = inlined_call_operand.vmem [shape: f32[320,4], index: 7, kind: output, shape index: {}]
  %s8 = sld [smem:[#allocation0]]
  $region61: #{feed_forward_actor.1} parent=0
    _
  %s10 = ssub.s32 1, %s8
  %s11 = scalar_select 0, %s10, %s8
  loop: start=0, step=1, limit=4
  $region2: #{feed_forward_actor.1} parent=0 // loop_pre_header
    _
  $region3: #{feed_forward_actor.1} parent=0 // loop_header
    %s13 = sphi 0, %s17
    %p14 = scmp.ge.s32.totalorder %s13, 4
    %s23 = sphi 0, %s25
    %s26 = sphi 0, %s23
    %s27 = sphi 0, %s26
    %s43 = sphi 0, %s27
    %s47 = sphi 0, %s47
    %s49 = sphi 0, %s47
    %s50 = sphi 0, %s49
    %s64 = sphi 0, %s50
    %s68 = sphi 0, %s68
    %s70 = sphi 0, %s68
    %s71 = sphi 0, %s70
    %s85 = sphi 0, %s71
    %s89 = sphi 0, %s89
    %s91 = sphi 0, %s89
    %s92 = sphi 0, %s91
    %s106 = sphi 0, %s92
    %s110 = sphi 0, %s110
    %s112 = sphi 0, %s110
    %s113 = sphi 0, %s112
    %s127 = sphi 0, %s113
    %s131 = sphi 0, %s131
    %s133 = sphi 0, %s131
    %s134 = sphi 0, %s133
    %s148 = sphi 0, %s134
    %s152 = sphi 0, %s152
    %s154 = sphi 0, %s152
    %s155 = sphi 0, %s154
    %s169 = sphi 0, %s155
    %s175 = sphi 0, %s177
    %s178 = sphi 0, %s175
    %s179 = sphi 0, %s178
    %s195 = sphi 0, %s179
  $region4: #{feed_forward_actor.1} parent=0 // loop_header_branch
    %16 = sbr.rel (%p14) target = $region8
  $region5: #{feed_forward_actor.1} parent=0 // loop_body
    %s18 = ssub.s32 %s13, 1
    %s19 = ssub.s32 %s13, 2
    %s20 = sadd.s32 %s13, 1
    %s21 = ssub.s32 %s13, %s20
    %p22 = scmp.eq.s32.totalorder %s21, 0
    %s24 = sadd.s32 %s23, 1
    %s25 = scalar_select %p22, %s23, %s24
    %p28 = pneg %p22
    %p29 = scmp.eq.s32.totalorder %s13, 1
    %p30 = por %p28, %p29
    %p31 = scmp.ne.s32.totalorder %s23, %s26
    %p32 = scmp.eq.s32.totalorder %s13, 0
    %p33 = por %p31, %p32
    %p34 = scmp.ne.s32.totalorder %s23, %s26
    %p35 = scmp.eq.s32.totalorder %s18, 1
    %p36 = por %p34, %p35
    %p37 = scmp.ne.s32.totalorder %s26, %s27
    %p38 = scmp.eq.s32.totalorder %s18, 0
    %p39 = por %p37, %p38
    %p40 = scmp.ne.s32.totalorder %s26, %s27
    %p41 = scmp.eq.s32.totalorder %s19, 1
    %p42 = por %p40, %p41
    %p44 = scmp.ne.s32.totalorder %s27, %s43
    %p45 = scmp.eq.s32.totalorder %s19, 0
    %p46 = por %p44, %p45
    %s48 = sadd.s32 %s47, 1
    %p51 = scmp.eq.s32.totalorder %s13, 1
    %p52 = scmp.ne.s32.totalorder %s47, %s49
    %p53 = scmp.eq.s32.totalorder %s13, 0
    %p54 = por %p52, %p53
    %p55 = scmp.ne.s32.totalorder %s47, %s49
    %p56 = scmp.eq.s32.totalorder %s18, 1
    %p57 = por %p55, %p56
    %p58 = scmp.ne.s32.totalorder %s49, %s50
    %p59 = scmp.eq.s32.totalorder %s18, 0
    %p60 = por %p58, %p59
    %p61 = scmp.ne.s32.totalorder %s49, %s50
    %p62 = scmp.eq.s32.totalorder %s19, 1
    %p63 = por %p61, %p62
    %p65 = scmp.ne.s32.totalorder %s50, %s64
    %p66 = scmp.eq.s32.totalorder %s19, 0
    %p67 = por %p65, %p66
    %s69 = sadd.s32 %s68, 1
    %p72 = scmp.eq.s32.totalorder %s13, 1
    %p73 = scmp.ne.s32.totalorder %s68, %s70
    %p74 = scmp.eq.s32.totalorder %s13, 0
    %p75 = por %p73, %p74
    %p76 = scmp.ne.s32.totalorder %s68, %s70
    %p77 = scmp.eq.s32.totalorder %s18, 1
    %p78 = por %p76, %p77
    %p79 = scmp.ne.s32.totalorder %s70, %s71
    %p80 = scmp.eq.s32.totalorder %s18, 0
    %p81 = por %p79, %p80
    %p82 = scmp.ne.s32.totalorder %s70, %s71
    %p83 = scmp.eq.s32.totalorder %s19, 1
    %p84 = por %p82, %p83
    %p86 = scmp.ne.s32.totalorder %s71, %s85
    %p87 = scmp.eq.s32.totalorder %s19, 0
    %p88 = por %p86, %p87
    %s90 = sadd.s32 %s89, 1
    %p93 = scmp.eq.s32.totalorder %s13, 1
    %p94 = scmp.ne.s32.totalorder %s89, %s91
    %p95 = scmp.eq.s32.totalorder %s13, 0
    %p96 = por %p94, %p95
    %p97 = scmp.ne.s32.totalorder %s89, %s91
    %p98 = scmp.eq.s32.totalorder %s18, 1
    %p99 = por %p97, %p98
    %p100 = scmp.ne.s32.totalorder %s91, %s92
    %p101 = scmp.eq.s32.totalorder %s18, 0
    %p102 = por %p100, %p101
    %p103 = scmp.ne.s32.totalorder %s91, %s92
    %p104 = scmp.eq.s32.totalorder %s19, 1
    %p105 = por %p103, %p104
    %p107 = scmp.ne.s32.totalorder %s92, %s106
    %p108 = scmp.eq.s32.totalorder %s19, 0
    %p109 = por %p107, %p108
    %s111 = sadd.s32 %s110, 1
    %p114 = scmp.eq.s32.totalorder %s13, 1
    %p115 = scmp.ne.s32.totalorder %s110, %s112
    %p116 = scmp.eq.s32.totalorder %s13, 0
    %p117 = por %p115, %p116
    %p118 = scmp.ne.s32.totalorder %s110, %s112
    %p119 = scmp.eq.s32.totalorder %s18, 1
    %p120 = por %p118, %p119
    %p121 = scmp.ne.s32.totalorder %s112, %s113
    %p122 = scmp.eq.s32.totalorder %s18, 0
    %p123 = por %p121, %p122
    %p124 = scmp.ne.s32.totalorder %s112, %s113
    %p125 = scmp.eq.s32.totalorder %s19, 1
    %p126 = por %p124, %p125
    %p128 = scmp.ne.s32.totalorder %s113, %s127
    %p129 = scmp.eq.s32.totalorder %s19, 0
    %p130 = por %p128, %p129
    %s132 = sadd.s32 %s131, 1
    %p135 = scmp.eq.s32.totalorder %s13, 1
    %p136 = scmp.ne.s32.totalorder %s131, %s133
    %p137 = scmp.eq.s32.totalorder %s13, 0
    %p138 = por %p136, %p137
    %p139 = scmp.ne.s32.totalorder %s131, %s133
    %p140 = scmp.eq.s32.totalorder %s18, 1
    %p141 = por %p139, %p140
    %p142 = scmp.ne.s32.totalorder %s133, %s134
    %p143 = scmp.eq.s32.totalorder %s18, 0
    %p144 = por %p142, %p143
    %p145 = scmp.ne.s32.totalorder %s133, %s134
    %p146 = scmp.eq.s32.totalorder %s19, 1
    %p147 = por %p145, %p146
    %p149 = scmp.ne.s32.totalorder %s134, %s148
    %p150 = scmp.eq.s32.totalorder %s19, 0
    %p151 = por %p149, %p150
    %s153 = sadd.s32 %s152, 1
    %p156 = scmp.eq.s32.totalorder %s13, 1
    %p157 = scmp.ne.s32.totalorder %s152, %s154
    %p158 = scmp.eq.s32.totalorder %s13, 0
    %p159 = por %p157, %p158
    %p160 = scmp.ne.s32.totalorder %s152, %s154
    %p161 = scmp.eq.s32.totalorder %s18, 1
    %p162 = por %p160, %p161
    %p163 = scmp.ne.s32.totalorder %s154, %s155
    %p164 = scmp.eq.s32.totalorder %s18, 0
    %p165 = por %p163, %p164
    %p166 = scmp.ne.s32.totalorder %s154, %s155
    %p167 = scmp.eq.s32.totalorder %s19, 1
    %p168 = por %p166, %p167
    %p170 = scmp.ne.s32.totalorder %s155, %s169
    %p171 = scmp.eq.s32.totalorder %s19, 0
    %p172 = por %p170, %p171
    %s173 = ssub.s32 %s13, %s20
    %p174 = scmp.eq.s32.totalorder %s173, 0
    %s176 = sadd.s32 %s175, 1
    %s177 = scalar_select %p174, %s175, %s176
    %p180 = pneg %p174
    %p181 = scmp.eq.s32.totalorder %s13, 1
    %p182 = por %p180, %p181
    %p183 = scmp.ne.s32.totalorder %s175, %s178
    %p184 = scmp.eq.s32.totalorder %s13, 0
    %p185 = por %p183, %p184
    %p186 = scmp.ne.s32.totalorder %s175, %s178
    %p187 = scmp.eq.s32.totalorder %s18, 1
    %p188 = por %p186, %p187
    %p189 = scmp.ne.s32.totalorder %s178, %s179
    %p190 = scmp.eq.s32.totalorder %s18, 0
    %p191 = por %p189, %p190
    %p192 = scmp.ne.s32.totalorder %s178, %s179
    %p193 = scmp.eq.s32.totalorder %s19, 1
    %p194 = por %p192, %p193
    %p196 = scmp.ne.s32.totalorder %s179, %s195
    %p197 = scmp.eq.s32.totalorder %s19, 0
    %p198 = por %p196, %p197
    %p199 = scmp.le.s32.totalorder 1, %s13
    %p200 = scmp.lt.s32.totalorder %s13, 3
    %p201 = pnand %p199, %p200
    %p202 = pneg %p201
    // Predicated region
    $region9: #{feed_forward_actor.1} parent=5 // pred_check
      _
    $region10: #{feed_forward_actor.1} parent=5 // pred_check_branch
      %204 = sbr.rel (%p201) target = $region12
    $region11: #{feed_forward_actor.1} parent=5 // pred_region
      %s205 = ssub.s32 %s13, 1
      // Predicated region
      $region13: #{feed_forward_actor.1} parent=11 // pred_check
        %p206 = pneg %p60
      $region14: #{feed_forward_actor.1} parent=11 // pred_check_branch
        %208 = sbr.rel (%p206) target = $region16
      $region15: #{feed_forward_actor.1} parent=11 // pred_region
        _
      $region16: #{feed_forward_actor.1} parent=11 // pred_fallthru
        _
      // Predicated region
      $region17: #{feed_forward_actor.1} parent=11 // pred_check
        %p209 = pneg %p81
      $region18: #{feed_forward_actor.1} parent=11 // pred_check_branch
        %211 = sbr.rel (%p209) target = $region20
      $region19: #{feed_forward_actor.1} parent=11 // pred_region
        _
      $region20: #{feed_forward_actor.1} parent=11 // pred_fallthru
        _
      // Predicated region
      $region21: #{feed_forward_actor.1} parent=11 // pred_check
        %p212 = pneg %p102
      $region22: #{feed_forward_actor.1} parent=11 // pred_check_branch
        %214 = sbr.rel (%p212) target = $region24
      $region23: #{feed_forward_actor.1} parent=11 // pred_region
        _
      $region24: #{feed_forward_actor.1} parent=11 // pred_fallthru
        _
      // Predicated region
      $region25: #{feed_forward_actor.1} parent=11 // pred_check
        %p215 = pneg %p123
      $region26: #{feed_forward_actor.1} parent=11 // pred_check_branch
        %217 = sbr.rel (%p215) target = $region28
      $region27: #{feed_forward_actor.1} parent=11 // pred_region
        _
      $region28: #{feed_forward_actor.1} parent=11 // pred_fallthru
        _
      // Predicated region
      $region29: #{feed_forward_actor.1} parent=11 // pred_check
        %p218 = pneg %p144
      $region30: #{feed_forward_actor.1} parent=11 // pred_check_branch
        %220 = sbr.rel (%p218) target = $region32
      $region31: #{feed_forward_actor.1} parent=11 // pred_region
        _
      $region32: #{feed_forward_actor.1} parent=11 // pred_fallthru
        _
      // Predicated region
      $region33: #{feed_forward_actor.1} parent=11 // pred_check
        %p221 = pneg %p165
      $region34: #{feed_forward_actor.1} parent=11 // pred_check_branch
        %223 = sbr.rel (%p221) target = $region36
      $region35: #{feed_forward_actor.1} parent=11 // pred_region
        _
      $region36: #{feed_forward_actor.1} parent=11 // pred_fallthru
        _
    $region12: #{feed_forward_actor.1} parent=5 // pred_fallthru
      _
    %p224 = scmp.lt.s32.totalorder %s13, 2
    // Predicated region
    $region37: #{feed_forward_actor.1} parent=5 // pred_check
      %p225 = pneg %p224
    $region38: #{feed_forward_actor.1} parent=5 // pred_check_branch
      %227 = sbr.rel (%p225) target = $region40
    $region39: #{feed_forward_actor.1} parent=5 // pred_region
      // Predicated region
      $region41: #{feed_forward_actor.1} parent=39 // pred_check
        %p228 = pneg %p33
      $region42: #{feed_forward_actor.1} parent=39 // pred_check_branch
        %230 = sbr.rel (%p228) target = $region44
      $region43: #{feed_forward_actor.1} parent=39 // pred_region
        %s231 = smul.u32 20, %s13
        %p232 = scmp.lt.s32.totalorder %s231, 39
        %s233 = scalar_select %p232, %s231, 39
        %s234 = smul.addr %s233, 4
        %s235 = scalar_lea.vmem %s0, %s234
        %s236 = smul.u32 20, %s13
      $region44: #{feed_forward_actor.1} parent=39 // pred_fallthru
        _
    $region40: #{feed_forward_actor.1} parent=5 // pred_fallthru
      _
    %p237 = scmp.le.s32.totalorder 1, %s13
    %p238 = scmp.lt.s32.totalorder %s13, 3
    %p239 = pnand %p237, %p238
    %p240 = pneg %p239
    // Predicated region
    $region45: #{feed_forward_actor.1} parent=5 // pred_check
      _
    $region46: #{feed_forward_actor.1} parent=5 // pred_check_branch
      %242 = sbr.rel (%p239) target = $region48
    $region47: #{feed_forward_actor.1} parent=5 // pred_region
      %s243 = ssub.s32 %s13, 1
      %s244 = smul.u32 20, %s18
      %p245 = scmp.lt.s32.totalorder %s244, 39
      %s246 = scalar_select %p245, %s244, 39
      %s247 = smul.addr %s246, 4
      %s248 = scalar_lea.vmem %s0, %s247
      %p249 = pneg %p39
      %p250 = pneg %p36
      %p251 = pneg %p60
      %p252 = pneg %p57
      %p253 = pneg %p81
      %p254 = pneg %p78
      %p255 = pneg %p102
      %p256 = pneg %p99
      %p257 = pneg %p123
      %p258 = pneg %p120
      %p259 = pneg %p144
      %p260 = pneg %p141
      %p261 = pneg %p165
      %p262 = pneg %p162
      %p263 = pneg %p191
      %p264 = pneg %p188
      %s265 = smul.u32 20, %s18
      %p266 = scmp.lt.s32.totalorder %s265, 39
      %s267 = scalar_select %p266, %s265, 39
      %s268 = smul.addr %s267, 8
      %s269 = scalar_lea.vmem %s7, %s268
      %s270 = smul.u32 20, %s18
      %p271 = scmp.lt.s32.totalorder %s270, 39
      %s272 = scalar_select %p271, %s270, 39
      %s273 = smul.addr %s272, 4
      %s274 = scalar_lea.vmem %s0, %s273
      %s275 = smul.u32 20, %s18
      %s276 = smul.u32 20, %s18
      %p277 = scmp.lt.s32.totalorder %s276, 39
      %s278 = scalar_select %p277, %s276, 39
      %s279 = smul.addr %s278, 8
      %s280 = scalar_lea.vmem %s7, %s279
      %s281 = smul.u32 20, %s18
      %v283 = vld [vmem:[%s274] sm:$0xf]
      %v284 = vld [vmem:[%s274 + $0x4] sm:$0xf]
      %v285 = vld [vmem:[%s274 + $0x8] sm:$0xf]
      %v286 = vld [vmem:[%s274 + $0xc] sm:$0xf]
      %v287 = vld [vmem:[%s274 + $0x10] sm:$0xf]
      %v288 = vld [vmem:[%s274 + $0x14] sm:$0xf]
      %v289 = vld [vmem:[%s274 + $0x18] sm:$0xf]
      %v290 = vld [vmem:[%s274 + $0x1c] sm:$0xf]
      %v291 = vld [vmem:[%s274 + $0x20] sm:$0xf]
      %v292 = vld [vmem:[%s274 + $0x24] sm:$0xf]
      %v293 = vld [vmem:[%s274 + $0x28] sm:$0xf]
      %v294 = vld [vmem:[%s274 + $0x2c] sm:$0xf]
      %v295 = vld [vmem:[%s274 + $0x30] sm:$0xf]
      %v296 = vld [vmem:[%s274 + $0x34] sm:$0xf]
      %v297 = vld [vmem:[%s274 + $0x38] sm:$0xf]
      %v298 = vld [vmem:[%s274 + $0x3c] sm:$0xf]
      %v299 = vld [vmem:[%s274 + $0x40] sm:$0xf]
      %v300 = vld [vmem:[%s274 + $0x44] sm:$0xf]
      %v301 = vld [vmem:[%s274 + $0x48] sm:$0xf]
      %v302 = vld [vmem:[%s274 + $0x4c] sm:$0xf]
      %v303 = vld [vmem:[%s1] sm:$0xf]
      %v304 = vld [vmem:[%s1 + $0x4] sm:$0xf]
      %v305 = vld [vmem:[%s2] sm:$0x1]
      %v306 = vlaneseq
      %v307 = vshrl.u32 %v306, 7
      %v308 = vsub.s32 0, %v307
      %v309 = vrot.slane %v305, %v308
      %v330 = vunpack.c.l.b16 %v283
      %v331 = vunpack.c.l.b16 %v284
      %v332 = vunpack.c.l.b16 %v285
      %v333 = vunpack.c.l.b16 %v286
      %v334 = vunpack.c.l.b16 %v287
      %v335 = vunpack.c.l.b16 %v288
      %v336 = vunpack.c.l.b16 %v289
      %v337 = vunpack.c.l.b16 %v290
      %v338 = vunpack.c.l.b16 %v291
      %v339 = vunpack.c.l.b16 %v292
      %v340 = vunpack.c.l.b16 %v293
      %v341 = vunpack.c.l.b16 %v294
      %v342 = vunpack.c.l.b16 %v295
      %v343 = vunpack.c.l.b16 %v296
      %v344 = vunpack.c.l.b16 %v297
      %v345 = vunpack.c.l.b16 %v298
      %v346 = vunpack.c.l.b16 %v299
      %v347 = vunpack.c.l.b16 %v300
      %v348 = vunpack.c.l.b16 %v301
      %v349 = vunpack.c.l.b16 %v302
      %v350 = vpack.c.b16 %v331, %v330
      %v351 = vpack.c.b16 %v333, %v332
      %v352 = vpack.c.b16 %v335, %v334
      %v353 = vpack.c.b16 %v337, %v336
      %v354 = vpack.c.b16 %v339, %v338
      %v355 = vpack.c.b16 %v341, %v340
      %v356 = vpack.c.b16 %v343, %v342
      %v357 = vpack.c.b16 %v345, %v344
      %v358 = vpack.c.b16 %v347, %v346
      %v359 = vpack.c.b16 %v349, %v348
      %v362 = vunpack.c.l.b16 %v303
      %v363 = vunpack.c.l.b16 %v304
      %v364 = vpack.c.b16 %v363, %v362
      %vm366 = vcmask 130048
      %v368 = vsel %vm366, %v350, 0
      %v371 = vsel %vm366, %v351, 0
      %v374 = vsel %vm366, %v352, 0
      %v377 = vsel %vm366, %v353, 0
      %v380 = vsel %vm366, %v354, 0
      %v383 = vsel %vm366, %v355, 0
      %v386 = vsel %vm366, %v356, 0
      %v389 = vsel %vm366, %v357, 0
      %v392 = vsel %vm366, %v358, 0
      %v395 = vsel %vm366, %v359, 0
      %397 = vmatprep.subr.bf16.mxu0 0
      %398 = vmatpush1.bf16.msra.mxu0 0
      %399 = vmatprep.subr.bf16.mxu0 0
      %400 = vmatpush1.bf16.msra.mxu0 0
      %401 = vmatprep.subr.bf16.mxu0 0
      %402 = vmatpush1.bf16.msra.mxu0 0
      %403 = vmatprep.subr.bf16.mxu0 0
      %404 = vmatpush1.bf16.msra.mxu0 0
      %405 = vmatprep.subr.bf16.mxu0 0
      %406 = vmatpush1.bf16.msra.mxu0 0
      %407 = vmatprep.subr.bf16.mxu0 0
      %408 = vmatpush1.bf16.msra.mxu0 0
      %409 = vmatprep.subr.bf16.mxu0 0
      %410 = vmatpush1.bf16.msra.mxu0 0
      %411 = vmatprep.subr.bf16.mxu0 0
      %412 = vmatpush1.bf16.msra.mxu0 %v364
      %413 = vmatprep.subr.bf16.mxu0 0
      %414 = vmatpush2.bf16.msra.mxu0 0
      %415 = vmatprep.subr.bf16.mxu0 0
      %416 = vmatpush2.bf16.msra.mxu0 0
      %417 = vmatprep.subr.bf16.mxu0 0
      %418 = vmatpush2.bf16.msra.mxu0 0
      %419 = vmatprep.subr.bf16.mxu0 0
      %420 = vmatpush2.bf16.msra.mxu0 0
      %421 = vmatprep.subr.bf16.mxu0 0
      %422 = vmatpush2.bf16.msra.mxu0 0
      %423 = vmatprep.subr.bf16.mxu0 0
      %424 = vmatpush2.bf16.msra.mxu0 0
      %425 = vmatprep.subr.bf16.mxu0 0
      %426 = vmatpush2.bf16.msra.mxu0 0
      %427 = vmatprep.subr.bf16.mxu0 0
      %428 = vmatpush2.bf16.msra.mxu0 0
      %429 = vmatprep.mubr.bf16.mxu0 0
      %430 = vmatmul.mubr.bf16.gmra.mxu0 %v368
      %v431 = vpop.f32.mrf.mxu0
      %v432 = vadd.f32 %v309, %v431
      %v433 = vpop.f32.mrf.mxu0
      %v434 = vpop.f32.mrf.mxu0
      %v435 = vadd.f32 %v309, %v434
      %v436 = vpop.f32.mrf.mxu0
      %437 = vmatprep.mubr.bf16.mxu0 0
      %438 = vmatmul.mubr.bf16.gmra.mxu0 %v371
      %v439 = vpop.f32.mrf.mxu0
      %v440 = vadd.f32 %v309, %v439
      %v441 = vpop.f32.mrf.mxu0
      %v442 = vpop.f32.mrf.mxu0
      %v443 = vadd.f32 %v309, %v442
      %v444 = vpop.f32.mrf.mxu0
      %445 = vmatprep.mubr.bf16.mxu0 0
      %446 = vmatmul.mubr.bf16.gmra.mxu0 %v374
      %v447 = vpop.f32.mrf.mxu0
      %v448 = vadd.f32 %v309, %v447
      %v449 = vpop.f32.mrf.mxu0
      %v450 = vpop.f32.mrf.mxu0
      %v451 = vadd.f32 %v309, %v450
      %v452 = vpop.f32.mrf.mxu0
      %453 = vmatprep.mubr.bf16.mxu0 0
      %454 = vmatmul.mubr.bf16.gmra.mxu0 %v377
      %v455 = vpop.f32.mrf.mxu0
      %v456 = vadd.f32 %v309, %v455
      %v457 = vpop.f32.mrf.mxu0
      %v458 = vpop.f32.mrf.mxu0
      %v459 = vadd.f32 %v309, %v458
      %v460 = vpop.f32.mrf.mxu0
      %461 = vmatprep.mubr.bf16.mxu0 0
      %462 = vmatmul.mubr.bf16.gmra.mxu0 %v380
      %v463 = vpop.f32.mrf.mxu0
      %v464 = vadd.f32 %v309, %v463
      %v465 = vpop.f32.mrf.mxu0
      %v466 = vpop.f32.mrf.mxu0
      %v467 = vadd.f32 %v309, %v466
      %v468 = vpop.f32.mrf.mxu0
      %469 = vmatprep.mubr.bf16.mxu0 0
      %470 = vmatmul.mubr.bf16.gmra.mxu0 %v383
      %v471 = vpop.f32.mrf.mxu0
      %v472 = vadd.f32 %v309, %v471
      %v473 = vpop.f32.mrf.mxu0
      %v474 = vpop.f32.mrf.mxu0
      %v475 = vadd.f32 %v309, %v474
      %v476 = vpop.f32.mrf.mxu0
      %477 = vmatprep.mubr.bf16.mxu0 0
      %478 = vmatmul.mubr.bf16.gmra.mxu0 %v386
      %v479 = vpop.f32.mrf.mxu0
      %v480 = vadd.f32 %v309, %v479
      %v481 = vpop.f32.mrf.mxu0
      %v482 = vpop.f32.mrf.mxu0
      %v483 = vadd.f32 %v309, %v482
      %v484 = vpop.f32.mrf.mxu0
      %485 = vmatprep.mubr.bf16.mxu0 0
      %486 = vmatmul.mubr.bf16.gmra.mxu0 %v389
      %v487 = vpop.f32.mrf.mxu0
      %v488 = vadd.f32 %v309, %v487
      %v489 = vpop.f32.mrf.mxu0
      %v490 = vpop.f32.mrf.mxu0
      %v491 = vadd.f32 %v309, %v490
      %v492 = vpop.f32.mrf.mxu0
      %493 = vmatprep.mubr.bf16.mxu0 0
      %494 = vmatmul.mubr.bf16.gmra.mxu0 %v392
      %v495 = vpop.f32.mrf.mxu0
      %v496 = vadd.f32 %v309, %v495
      %v497 = vpop.f32.mrf.mxu0
      %v498 = vpop.f32.mrf.mxu0
      %v499 = vadd.f32 %v309, %v498
      %v500 = vpop.f32.mrf.mxu0
      %501 = vmatprep.mubr.bf16.mxu0 0
      %502 = vmatmul.mubr.bf16.gmra.mxu0 %v395
      %v503 = vpop.f32.mrf.mxu0
      %v504 = vadd.f32 %v309, %v503
      %v505 = vpop.f32.mrf.mxu0
      %v506 = vpop.f32.mrf.mxu0
      %v507 = vadd.f32 %v309, %v506
      %v508 = vpop.f32.mrf.mxu0
      %509 = vdwg.mxu0
      %510 = vadd.xlane.f32.xlu0 %v432
      %v511 = vpop.xlane.xlu0 %510
      %512 = vadd.xlane.f32.xlu0 %v435
      %v513 = vpop.xlane.xlu0 %512
      %514 = vadd.xlane.f32.xlu0 %v440
      %v515 = vpop.xlane.xlu0 %514
      %516 = vadd.xlane.f32.xlu0 %v443
      %v517 = vpop.xlane.xlu0 %516
      %518 = vadd.xlane.f32.xlu0 %v448
      %v519 = vpop.xlane.xlu0 %518
      %520 = vadd.xlane.f32.xlu0 %v451
      %v521 = vpop.xlane.xlu0 %520
      %522 = vadd.xlane.f32.xlu0 %v456
      %v523 = vpop.xlane.xlu0 %522
      %524 = vadd.xlane.f32.xlu0 %v459
      %v525 = vpop.xlane.xlu0 %524
      %526 = vadd.xlane.f32.xlu0 %v464
      %v527 = vpop.xlane.xlu0 %526
      %528 = vadd.xlane.f32.xlu0 %v467
      %v529 = vpop.xlane.xlu0 %528
      %530 = vadd.xlane.f32.xlu0 %v472
      %v531 = vpop.xlane.xlu0 %530
      %532 = vadd.xlane.f32.xlu0 %v475
      %v533 = vpop.xlane.xlu0 %532
      %534 = vadd.xlane.f32.xlu0 %v480
      %v535 = vpop.xlane.xlu0 %534
      %536 = vadd.xlane.f32.xlu0 %v483
      %v537 = vpop.xlane.xlu0 %536
      %538 = vadd.xlane.f32.xlu0 %v488
      %v539 = vpop.xlane.xlu0 %538
      %540 = vadd.xlane.f32.xlu0 %v491
      %v541 = vpop.xlane.xlu0 %540
      %542 = vadd.xlane.f32.xlu0 %v496
      %v543 = vpop.xlane.xlu0 %542
      %544 = vadd.xlane.f32.xlu0 %v499
      %v545 = vpop.xlane.xlu0 %544
      %546 = vadd.xlane.f32.xlu0 %v504
      %v547 = vpop.xlane.xlu0 %546
      %548 = vadd.xlane.f32.xlu0 %v507
      %v549 = vpop.xlane.xlu0 %548
      %v550 = vrcp.pop 128.0
      %v551 = vmul.f32 %v511, %v550
      %v552 = vmul.f32 %v513, %v550
      %v553 = vmul.f32 %v515, %v550
      %v554 = vmul.f32 %v517, %v550
      %v555 = vmul.f32 %v519, %v550
      %v556 = vmul.f32 %v521, %v550
      %v557 = vmul.f32 %v523, %v550
      %v558 = vmul.f32 %v525, %v550
      %v559 = vmul.f32 %v527, %v550
      %v560 = vmul.f32 %v529, %v550
      %v561 = vmul.f32 %v531, %v550
      %v562 = vmul.f32 %v533, %v550
      %v563 = vmul.f32 %v535, %v550
      %v564 = vmul.f32 %v537, %v550
      %v565 = vmul.f32 %v539, %v550
      %v566 = vmul.f32 %v541, %v550
      %v567 = vmul.f32 %v543, %v550
      %v568 = vmul.f32 %v545, %v550
      %v569 = vmul.f32 %v547, %v550
      %v570 = vmul.f32 %v549, %v550
      %v571 = vmul.f32 %v432, %v432
      %v572 = vmul.f32 %v435, %v435
      %v573 = vmul.f32 %v440, %v440
      %v574 = vmul.f32 %v443, %v443
      %v575 = vmul.f32 %v448, %v448
      %v576 = vmul.f32 %v451, %v451
      %v577 = vmul.f32 %v456, %v456
      %v578 = vmul.f32 %v459, %v459
      %v579 = vmul.f32 %v464, %v464
      %v580 = vmul.f32 %v467, %v467
      %v581 = vmul.f32 %v472, %v472
      %v582 = vmul.f32 %v475, %v475
      %v583 = vmul.f32 %v480, %v480
      %v584 = vmul.f32 %v483, %v483
      %v585 = vmul.f32 %v488, %v488
      %v586 = vmul.f32 %v491, %v491
      %v587 = vmul.f32 %v496, %v496
      %v588 = vmul.f32 %v499, %v499
      %v589 = vmul.f32 %v504, %v504
      %v590 = vmul.f32 %v507, %v507
      %591 = vadd.xlane.f32.xlu0 %v571
      %v592 = vpop.xlane.xlu0 %591
      %593 = vadd.xlane.f32.xlu0 %v572
      %v594 = vpop.xlane.xlu0 %593
      %595 = vadd.xlane.f32.xlu0 %v573
      %v596 = vpop.xlane.xlu0 %595
      %597 = vadd.xlane.f32.xlu0 %v574
      %v598 = vpop.xlane.xlu0 %597
      %599 = vadd.xlane.f32.xlu0 %v575
      %v600 = vpop.xlane.xlu0 %599
      %601 = vadd.xlane.f32.xlu0 %v576
      %v602 = vpop.xlane.xlu0 %601
      %603 = vadd.xlane.f32.xlu0 %v577
      %v604 = vpop.xlane.xlu0 %603
      %605 = vadd.xlane.f32.xlu0 %v578
      %v606 = vpop.xlane.xlu0 %605
      %607 = vadd.xlane.f32.xlu0 %v579
      %v608 = vpop.xlane.xlu0 %607
      %609 = vadd.xlane.f32.xlu0 %v580
      %v610 = vpop.xlane.xlu0 %609
      %611 = vadd.xlane.f32.xlu0 %v581
      %v612 = vpop.xlane.xlu0 %611
      %613 = vadd.xlane.f32.xlu0 %v582
      %v614 = vpop.xlane.xlu0 %613
      %615 = vadd.xlane.f32.xlu0 %v583
      %v616 = vpop.xlane.xlu0 %615
      %617 = vadd.xlane.f32.xlu0 %v584
      %v618 = vpop.xlane.xlu0 %617
      %619 = vadd.xlane.f32.xlu0 %v585
      %v620 = vpop.xlane.xlu0 %619
      %621 = vadd.xlane.f32.xlu0 %v586
      %v622 = vpop.xlane.xlu0 %621
      %623 = vadd.xlane.f32.xlu0 %v587
      %v624 = vpop.xlane.xlu0 %623
      %625 = vadd.xlane.f32.xlu0 %v588
      %v626 = vpop.xlane.xlu0 %625
      %627 = vadd.xlane.f32.xlu0 %v589
      %v628 = vpop.xlane.xlu0 %627
      %629 = vadd.xlane.f32.xlu0 %v590
      %v630 = vpop.xlane.xlu0 %629
      %v631 = vmul.f32 %v592, %v550
      %v632 = vmul.f32 %v594, %v550
      %v633 = vmul.f32 %v596, %v550
      %v634 = vmul.f32 %v598, %v550
      %v635 = vmul.f32 %v600, %v550
      %v636 = vmul.f32 %v602, %v550
      %v637 = vmul.f32 %v604, %v550
      %v638 = vmul.f32 %v606, %v550
      %v639 = vmul.f32 %v608, %v550
      %v640 = vmul.f32 %v610, %v550
      %v641 = vmul.f32 %v612, %v550
      %v642 = vmul.f32 %v614, %v550
      %v643 = vmul.f32 %v616, %v550
      %v644 = vmul.f32 %v618, %v550
      %v645 = vmul.f32 %v620, %v550
      %v646 = vmul.f32 %v622, %v550
      %v647 = vmul.f32 %v624, %v550
      %v648 = vmul.f32 %v626, %v550
      %v649 = vmul.f32 %v628, %v550
      %v650 = vmul.f32 %v630, %v550
      %v651 = vmul.f32 %v551, %v551
      %v652 = vmul.f32 %v552, %v552
      %v653 = vmul.f32 %v553, %v553
      %v654 = vmul.f32 %v554, %v554
      %v655 = vmul.f32 %v555, %v555
      %v656 = vmul.f32 %v556, %v556
      %v657 = vmul.f32 %v557, %v557
      %v658 = vmul.f32 %v558, %v558
      %v659 = vmul.f32 %v559, %v559
      %v660 = vmul.f32 %v560, %v560
      %v661 = vmul.f32 %v561, %v561
      %v662 = vmul.f32 %v562, %v562
      %v663 = vmul.f32 %v563, %v563
      %v664 = vmul.f32 %v564, %v564
      %v665 = vmul.f32 %v565, %v565
      %v666 = vmul.f32 %v566, %v566
      %v667 = vmul.f32 %v567, %v567
      %v668 = vmul.f32 %v568, %v568
      %v669 = vmul.f32 %v569, %v569
      %v670 = vmul.f32 %v570, %v570
      %v671 = vsub.f32 %v631, %v651
      %v672 = vsub.f32 %v632, %v652
      %v673 = vsub.f32 %v633, %v653
      %v674 = vsub.f32 %v634, %v654
      %v675 = vsub.f32 %v635, %v655
      %v676 = vsub.f32 %v636, %v656
      %v677 = vsub.f32 %v637, %v657
      %v678 = vsub.f32 %v638, %v658
      %v679 = vsub.f32 %v639, %v659
      %v680 = vsub.f32 %v640, %v660
      %v681 = vsub.f32 %v641, %v661
      %v682 = vsub.f32 %v642, %v662
      %v683 = vsub.f32 %v643, %v663
      %v684 = vsub.f32 %v644, %v664
      %v685 = vsub.f32 %v645, %v665
      %v686 = vsub.f32 %v646, %v666
      %v687 = vsub.f32 %v647, %v667
      %v688 = vsub.f32 %v648, %v668
      %v689 = vsub.f32 %v649, %v669
      %v690 = vsub.f32 %v650, %v670
      %v691 = vsub.f32 %v432, %v551
      %v692 = vsub.f32 %v435, %v552
      %v693 = vsub.f32 %v440, %v553
      %v694 = vsub.f32 %v443, %v554
      %v695 = vsub.f32 %v448, %v555
      %v696 = vsub.f32 %v451, %v556
      %v697 = vsub.f32 %v456, %v557
      %v698 = vsub.f32 %v459, %v558
      %v699 = vsub.f32 %v464, %v559
      %v700 = vsub.f32 %v467, %v560
      %v701 = vsub.f32 %v472, %v561
      %v702 = vsub.f32 %v475, %v562
      %v703 = vsub.f32 %v480, %v563
      %v704 = vsub.f32 %v483, %v564
      %v705 = vsub.f32 %v488, %v565
      %v706 = vsub.f32 %v491, %v566
      %v707 = vsub.f32 %v496, %v567
      %v708 = vsub.f32 %v499, %v568
      %v709 = vsub.f32 %v504, %v569
      %v710 = vsub.f32 %v507, %v570
      %v711 = vadd.f32 %v671, 1e-05
      %v712 = vadd.f32 %v672, 1e-05
      %v713 = vadd.f32 %v673, 1e-05
      %v714 = vadd.f32 %v674, 1e-05
      %v715 = vadd.f32 %v675, 1e-05
      %v716 = vadd.f32 %v676, 1e-05
      %v717 = vadd.f32 %v677, 1e-05
      %v718 = vadd.f32 %v678, 1e-05
      %v719 = vadd.f32 %v679, 1e-05
      %v720 = vadd.f32 %v680, 1e-05
      %v721 = vadd.f32 %v681, 1e-05
      %v722 = vadd.f32 %v682, 1e-05
      %v723 = vadd.f32 %v683, 1e-05
      %v724 = vadd.f32 %v684, 1e-05
      %v725 = vadd.f32 %v685, 1e-05
      %v726 = vadd.f32 %v686, 1e-05
      %v727 = vadd.f32 %v687, 1e-05
      %v728 = vadd.f32 %v688, 1e-05
      %v729 = vadd.f32 %v689, 1e-05
      %v730 = vadd.f32 %v690, 1e-05
      %v731 = vrsqrt.pop %v711
      %v732 = vrsqrt.pop %v712
      %v733 = vrsqrt.pop %v713
      %v734 = vrsqrt.pop %v714
      %v735 = vrsqrt.pop %v715
      %v736 = vrsqrt.pop %v716
      %v737 = vrsqrt.pop %v717
      %v738 = vrsqrt.pop %v718
      %v739 = vrsqrt.pop %v719
      %v740 = vrsqrt.pop %v720
      %v741 = vrsqrt.pop %v721
      %v742 = vrsqrt.pop %v722
      %v743 = vrsqrt.pop %v723
      %v744 = vrsqrt.pop %v724
      %v745 = vrsqrt.pop %v725
      %v746 = vrsqrt.pop %v726
      %v747 = vrsqrt.pop %v727
      %v748 = vrsqrt.pop %v728
      %v749 = vrsqrt.pop %v729
      %v750 = vrsqrt.pop %v730
      %v751 = vmul.f32 %v691, %v731
      %v752 = vmul.f32 %v692, %v732
      %v753 = vmul.f32 %v693, %v733
      %v754 = vmul.f32 %v694, %v734
      %v755 = vmul.f32 %v695, %v735
      %v756 = vmul.f32 %v696, %v736
      %v757 = vmul.f32 %v697, %v737
      %v758 = vmul.f32 %v698, %v738
      %v759 = vmul.f32 %v699, %v739
      %v760 = vmul.f32 %v700, %v740
      %v761 = vmul.f32 %v701, %v741
      %v762 = vmul.f32 %v702, %v742
      %v763 = vmul.f32 %v703, %v743
      %v764 = vmul.f32 %v704, %v744
      %v765 = vmul.f32 %v705, %v745
      %v766 = vmul.f32 %v706, %v746
      %v767 = vmul.f32 %v707, %v747
      %v768 = vmul.f32 %v708, %v748
      %v769 = vmul.f32 %v709, %v749
      %v770 = vmul.f32 %v710, %v750
      %v771 = vld [vmem:[%s2 + $0x1] sm:$0x1]
      %v772 = vlaneseq
      %v773 = vshrl.u32 %v772, 7
      %v774 = vsub.s32 0, %v773
      %v775 = vrot.slane %v771, %v774
      %v776 = vmul.f32 %v751, %v775
      %v777 = vmul.f32 %v752, %v775
      %v778 = vmul.f32 %v753, %v775
      %v779 = vmul.f32 %v754, %v775
      %v780 = vmul.f32 %v755, %v775
      %v781 = vmul.f32 %v756, %v775
      %v782 = vmul.f32 %v757, %v775
      %v783 = vmul.f32 %v758, %v775
      %v784 = vmul.f32 %v759, %v775
      %v785 = vmul.f32 %v760, %v775
      %v786 = vmul.f32 %v761, %v775
      %v787 = vmul.f32 %v762, %v775
      %v788 = vmul.f32 %v763, %v775
      %v789 = vmul.f32 %v764, %v775
      %v790 = vmul.f32 %v765, %v775
      %v791 = vmul.f32 %v766, %v775
      %v792 = vmul.f32 %v767, %v775
      %v793 = vmul.f32 %v768, %v775
      %v794 = vmul.f32 %v769, %v775
      %v795 = vmul.f32 %v770, %v775
      %v796 = vld [vmem:[%s2 + $0x2] sm:$0x1]
      %v797 = vlaneseq
      %v798 = vshrl.u32 %v797, 7
      %v799 = vsub.s32 0, %v798
      %v800 = vrot.slane %v796, %v799
      %v801 = vadd.f32 %v776, %v800
      %v802 = vadd.f32 %v777, %v800
      %v803 = vadd.f32 %v778, %v800
      %v804 = vadd.f32 %v779, %v800
      %v805 = vadd.f32 %v780, %v800
      %v806 = vadd.f32 %v781, %v800
      %v807 = vadd.f32 %v782, %v800
      %v808 = vadd.f32 %v783, %v800
      %v809 = vadd.f32 %v784, %v800
      %v810 = vadd.f32 %v785, %v800
      %v811 = vadd.f32 %v786, %v800
      %v812 = vadd.f32 %v787, %v800
      %v813 = vadd.f32 %v788, %v800
      %v814 = vadd.f32 %v789, %v800
      %v815 = vadd.f32 %v790, %v800
      %v816 = vadd.f32 %v791, %v800
      %v817 = vadd.f32 %v792, %v800
      %v818 = vadd.f32 %v793, %v800
      %v819 = vadd.f32 %v794, %v800
      %v820 = vadd.f32 %v795, %v800
      %v821 = vmax.f32 %v801, 0.0
      %v822 = vmax.f32 %v802, 0.0
      %v823 = vmax.f32 %v803, 0.0
      %v824 = vmax.f32 %v804, 0.0
      %v825 = vmax.f32 %v805, 0.0
      %v826 = vmax.f32 %v806, 0.0
      %v827 = vmax.f32 %v807, 0.0
      %v828 = vmax.f32 %v808, 0.0
      %v829 = vmax.f32 %v809, 0.0
      %v830 = vmax.f32 %v810, 0.0
      %v831 = vmax.f32 %v811, 0.0
      %v832 = vmax.f32 %v812, 0.0
      %v833 = vmax.f32 %v813, 0.0
      %v834 = vmax.f32 %v814, 0.0
      %v835 = vmax.f32 %v815, 0.0
      %v836 = vmax.f32 %v816, 0.0
      %v837 = vmax.f32 %v817, 0.0
      %v838 = vmax.f32 %v818, 0.0
      %v839 = vmax.f32 %v819, 0.0
      %v840 = vmax.f32 %v820, 0.0
      %v841 = vpack.c.bf16 %v822, %v821
      %v842 = vpack.c.bf16 %v824, %v823
      %v843 = vpack.c.bf16 %v826, %v825
      %v844 = vpack.c.bf16 %v828, %v827
      %v845 = vpack.c.bf16 %v830, %v829
      %v846 = vpack.c.bf16 %v832, %v831
      %v847 = vpack.c.bf16 %v834, %v833
      %v848 = vpack.c.bf16 %v836, %v835
      %v849 = vpack.c.bf16 %v838, %v837
      %v850 = vpack.c.bf16 %v840, %v839
      %v851 = vld [vmem:[%s3] sm:$0xf]
      %v852 = vld [vmem:[%s3 + $0x4] sm:$0xf]
      %v853 = vld [vmem:[%s3 + $0x8] sm:$0xf]
      %v854 = vld [vmem:[%s3 + $0xc] sm:$0xf]
      %v855 = vld [vmem:[%s3 + $0x10] sm:$0xf]
      %v856 = vld [vmem:[%s3 + $0x14] sm:$0xf]
      %v857 = vld [vmem:[%s3 + $0x18] sm:$0xf]
      %v858 = vld [vmem:[%s3 + $0x1c] sm:$0xf]
      %v859 = vld [vmem:[%s3 + $0x20] sm:$0xf]
      %v860 = vld [vmem:[%s3 + $0x24] sm:$0xf]
      %v861 = vld [vmem:[%s3 + $0x28] sm:$0xf]
      %v862 = vld [vmem:[%s3 + $0x2c] sm:$0xf]
      %v863 = vld [vmem:[%s3 + $0x30] sm:$0xf]
      %v864 = vld [vmem:[%s3 + $0x34] sm:$0xf]
      %v865 = vld [vmem:[%s3 + $0x38] sm:$0xf]
      %v866 = vld [vmem:[%s3 + $0x3c] sm:$0xf]
      %v867 = vld [vmem:[%s4] sm:$0x1]
      %v868 = vlaneseq
      %v869 = vshrl.u32 %v868, 7
      %v870 = vsub.s32 0, %v869
      %v871 = vrot.slane %v867, %v870
      %v888 = vunpack.c.l.b16 %v851
      %v889 = vunpack.c.l.b16 %v852
      %v890 = vunpack.c.l.b16 %v853
      %v891 = vunpack.c.l.b16 %v854
      %v892 = vunpack.c.l.b16 %v855
      %v893 = vunpack.c.l.b16 %v856
      %v894 = vunpack.c.l.b16 %v857
      %v895 = vunpack.c.l.b16 %v858
      %v896 = vunpack.c.l.b16 %v859
      %v897 = vunpack.c.l.b16 %v860
      %v898 = vunpack.c.l.b16 %v861
      %v899 = vunpack.c.l.b16 %v862
      %v900 = vunpack.c.l.b16 %v863
      %v901 = vunpack.c.l.b16 %v864
      %v902 = vunpack.c.l.b16 %v865
      %v903 = vunpack.c.l.b16 %v866
      %v904 = vpack.c.b16 %v889, %v888
      %v905 = vpack.c.b16 %v891, %v890
      %v906 = vpack.c.b16 %v893, %v892
      %v907 = vpack.c.b16 %v895, %v894
      %v908 = vpack.c.b16 %v897, %v896
      %v909 = vpack.c.b16 %v899, %v898
      %v910 = vpack.c.b16 %v901, %v900
      %v911 = vpack.c.b16 %v903, %v902
      %920 = vmatprep.subr.bf16.mxu0 0
      %921 = vmatpush1.bf16.msra.mxu0 %v911
      %922 = vmatprep.subr.bf16.mxu0 0
      %923 = vmatpush1.bf16.msra.mxu0 %v910
      %924 = vmatprep.subr.bf16.mxu0 0
      %925 = vmatpush1.bf16.msra.mxu0 %v909
      %926 = vmatprep.subr.bf16.mxu0 0
      %927 = vmatpush1.bf16.msra.mxu0 %v908
      %928 = vmatprep.subr.bf16.mxu0 0
      %929 = vmatpush1.bf16.msra.mxu0 %v907
      %930 = vmatprep.subr.bf16.mxu0 0
      %931 = vmatpush1.bf16.msra.mxu0 %v906
      %932 = vmatprep.subr.bf16.mxu0 0
      %933 = vmatpush1.bf16.msra.mxu0 %v905
      %934 = vmatprep.subr.bf16.mxu0 0
      %935 = vmatpush1.bf16.msra.mxu0 %v904
      %936 = vmatprep.subr.bf16.mxu0 0
      %937 = vmatpush2.bf16.msra.mxu0 0
      %938 = vmatprep.subr.bf16.mxu0 0
      %939 = vmatpush2.bf16.msra.mxu0 0
      %940 = vmatprep.subr.bf16.mxu0 0
      %941 = vmatpush2.bf16.msra.mxu0 0
      %942 = vmatprep.subr.bf16.mxu0 0
      %943 = vmatpush2.bf16.msra.mxu0 0
      %944 = vmatprep.subr.bf16.mxu0 0
      %945 = vmatpush2.bf16.msra.mxu0 0
      %946 = vmatprep.subr.bf16.mxu0 0
      %947 = vmatpush2.bf16.msra.mxu0 0
      %948 = vmatprep.subr.bf16.mxu0 0
      %949 = vmatpush2.bf16.msra.mxu0 0
      %950 = vmatprep.subr.bf16.mxu0 0
      %951 = vmatpush2.bf16.msra.mxu0 0
      %952 = vmatprep.mubr.bf16.mxu0 0
      %953 = vmatmul.mubr.bf16.gmra.mxu0 %v841
      %v954 = vpop.f32.mrf.mxu0
      %v955 = vadd.f32 %v871, %v954
      %v956 = vpop.f32.mrf.mxu0
      %v957 = vpop.f32.mrf.mxu0
      %v958 = vadd.f32 %v871, %v957
      %v959 = vpop.f32.mrf.mxu0
      %960 = vmatprep.mubr.bf16.mxu0 0
      %961 = vmatmul.mubr.bf16.gmra.mxu0 %v842
      %v962 = vpop.f32.mrf.mxu0
      %v963 = vadd.f32 %v871, %v962
      %v964 = vpop.f32.mrf.mxu0
      %v965 = vpop.f32.mrf.mxu0
      %v966 = vadd.f32 %v871, %v965
      %v967 = vpop.f32.mrf.mxu0
      %968 = vmatprep.mubr.bf16.mxu0 0
      %969 = vmatmul.mubr.bf16.gmra.mxu0 %v843
      %v970 = vpop.f32.mrf.mxu0
      %v971 = vadd.f32 %v871, %v970
      %v972 = vpop.f32.mrf.mxu0
      %v973 = vpop.f32.mrf.mxu0
      %v974 = vadd.f32 %v871, %v973
      %v975 = vpop.f32.mrf.mxu0
      %976 = vmatprep.mubr.bf16.mxu0 0
      %977 = vmatmul.mubr.bf16.gmra.mxu0 %v844
      %v978 = vpop.f32.mrf.mxu0
      %v979 = vadd.f32 %v871, %v978
      %v980 = vpop.f32.mrf.mxu0
      %v981 = vpop.f32.mrf.mxu0
      %v982 = vadd.f32 %v871, %v981
      %v983 = vpop.f32.mrf.mxu0
      %984 = vmatprep.mubr.bf16.mxu0 0
      %985 = vmatmul.mubr.bf16.gmra.mxu0 %v845
      %v986 = vpop.f32.mrf.mxu0
      %v987 = vadd.f32 %v871, %v986
      %v988 = vpop.f32.mrf.mxu0
      %v989 = vpop.f32.mrf.mxu0
      %v990 = vadd.f32 %v871, %v989
      %v991 = vpop.f32.mrf.mxu0
      %992 = vmatprep.mubr.bf16.mxu0 0
      %993 = vmatmul.mubr.bf16.gmra.mxu0 %v846
      %v994 = vpop.f32.mrf.mxu0
      %v995 = vadd.f32 %v871, %v994
      %v996 = vpop.f32.mrf.mxu0
      %v997 = vpop.f32.mrf.mxu0
      %v998 = vadd.f32 %v871, %v997
      %v999 = vpop.f32.mrf.mxu0
      %1000 = vmatprep.mubr.bf16.mxu0 0
      %1001 = vmatmul.mubr.bf16.gmra.mxu0 %v847
      %v1002 = vpop.f32.mrf.mxu0
      %v1003 = vadd.f32 %v871, %v1002
      %v1004 = vpop.f32.mrf.mxu0
      %v1005 = vpop.f32.mrf.mxu0
      %v1006 = vadd.f32 %v871, %v1005
      %v1007 = vpop.f32.mrf.mxu0
      %1008 = vmatprep.mubr.bf16.mxu0 0
      %1009 = vmatmul.mubr.bf16.gmra.mxu0 %v848
      %v1010 = vpop.f32.mrf.mxu0
      %v1011 = vadd.f32 %v871, %v1010
      %v1012 = vpop.f32.mrf.mxu0
      %v1013 = vpop.f32.mrf.mxu0
      %v1014 = vadd.f32 %v871, %v1013
      %v1015 = vpop.f32.mrf.mxu0
      %1016 = vmatprep.mubr.bf16.mxu0 0
      %1017 = vmatmul.mubr.bf16.gmra.mxu0 %v849
      %v1018 = vpop.f32.mrf.mxu0
      %v1019 = vadd.f32 %v871, %v1018
      %v1020 = vpop.f32.mrf.mxu0
      %v1021 = vpop.f32.mrf.mxu0
      %v1022 = vadd.f32 %v871, %v1021
      %v1023 = vpop.f32.mrf.mxu0
      %1024 = vmatprep.mubr.bf16.mxu0 0
      %1025 = vmatmul.mubr.bf16.gmra.mxu0 %v850
      %v1026 = vpop.f32.mrf.mxu0
      %v1027 = vadd.f32 %v871, %v1026
      %v1028 = vpop.f32.mrf.mxu0
      %v1029 = vpop.f32.mrf.mxu0
      %v1030 = vadd.f32 %v871, %v1029
      %v1031 = vpop.f32.mrf.mxu0
      %1032 = vdwg.mxu0
      %1033 = vadd.xlane.f32.xlu0 %v955
      %v1034 = vpop.xlane.xlu0 %1033
      %1035 = vadd.xlane.f32.xlu0 %v958
      %v1036 = vpop.xlane.xlu0 %1035
      %1037 = vadd.xlane.f32.xlu0 %v963
      %v1038 = vpop.xlane.xlu0 %1037
      %1039 = vadd.xlane.f32.xlu0 %v966
      %v1040 = vpop.xlane.xlu0 %1039
      %1041 = vadd.xlane.f32.xlu0 %v971
      %v1042 = vpop.xlane.xlu0 %1041
      %1043 = vadd.xlane.f32.xlu0 %v974
      %v1044 = vpop.xlane.xlu0 %1043
      %1045 = vadd.xlane.f32.xlu0 %v979
      %v1046 = vpop.xlane.xlu0 %1045
      %1047 = vadd.xlane.f32.xlu0 %v982
      %v1048 = vpop.xlane.xlu0 %1047
      %1049 = vadd.xlane.f32.xlu0 %v987
      %v1050 = vpop.xlane.xlu0 %1049
      %1051 = vadd.xlane.f32.xlu0 %v990
      %v1052 = vpop.xlane.xlu0 %1051
      %1053 = vadd.xlane.f32.xlu0 %v995
      %v1054 = vpop.xlane.xlu0 %1053
      %1055 = vadd.xlane.f32.xlu0 %v998
      %v1056 = vpop.xlane.xlu0 %1055
      %1057 = vadd.xlane.f32.xlu0 %v1003
      %v1058 = vpop.xlane.xlu0 %1057
      %1059 = vadd.xlane.f32.xlu0 %v1006
      %v1060 = vpop.xlane.xlu0 %1059
      %1061 = vadd.xlane.f32.xlu0 %v1011
      %v1062 = vpop.xlane.xlu0 %1061
      %1063 = vadd.xlane.f32.xlu0 %v1014
      %v1064 = vpop.xlane.xlu0 %1063
      %1065 = vadd.xlane.f32.xlu0 %v1019
      %v1066 = vpop.xlane.xlu0 %1065
      %1067 = vadd.xlane.f32.xlu0 %v1022
      %v1068 = vpop.xlane.xlu0 %1067
      %1069 = vadd.xlane.f32.xlu0 %v1027
      %v1070 = vpop.xlane.xlu0 %1069
      %1071 = vadd.xlane.f32.xlu0 %v1030
      %v1072 = vpop.xlane.xlu0 %1071
      %v1073 = vmul.f32 %v1034, %v550
      %v1074 = vmul.f32 %v1036, %v550
      %v1075 = vmul.f32 %v1038, %v550
      %v1076 = vmul.f32 %v1040, %v550
      %v1077 = vmul.f32 %v1042, %v550
      %v1078 = vmul.f32 %v1044, %v550
      %v1079 = vmul.f32 %v1046, %v550
      %v1080 = vmul.f32 %v1048, %v550
      %v1081 = vmul.f32 %v1050, %v550
      %v1082 = vmul.f32 %v1052, %v550
      %v1083 = vmul.f32 %v1054, %v550
      %v1084 = vmul.f32 %v1056, %v550
      %v1085 = vmul.f32 %v1058, %v550
      %v1086 = vmul.f32 %v1060, %v550
      %v1087 = vmul.f32 %v1062, %v550
      %v1088 = vmul.f32 %v1064, %v550
      %v1089 = vmul.f32 %v1066, %v550
      %v1090 = vmul.f32 %v1068, %v550
      %v1091 = vmul.f32 %v1070, %v550
      %v1092 = vmul.f32 %v1072, %v550
      %v1093 = vmul.f32 %v955, %v955
      %v1094 = vmul.f32 %v958, %v958
      %v1095 = vmul.f32 %v963, %v963
      %v1096 = vmul.f32 %v966, %v966
      %v1097 = vmul.f32 %v971, %v971
      %v1098 = vmul.f32 %v974, %v974
      %v1099 = vmul.f32 %v979, %v979
      %v1100 = vmul.f32 %v982, %v982
      %v1101 = vmul.f32 %v987, %v987
      %v1102 = vmul.f32 %v990, %v990
      %v1103 = vmul.f32 %v995, %v995
      %v1104 = vmul.f32 %v998, %v998
      %v1105 = vmul.f32 %v1003, %v1003
      %v1106 = vmul.f32 %v1006, %v1006
      %v1107 = vmul.f32 %v1011, %v1011
      %v1108 = vmul.f32 %v1014, %v1014
      %v1109 = vmul.f32 %v1019, %v1019
      %v1110 = vmul.f32 %v1022, %v1022
      %v1111 = vmul.f32 %v1027, %v1027
      %v1112 = vmul.f32 %v1030, %v1030
      %1113 = vadd.xlane.f32.xlu0 %v1093
      %v1114 = vpop.xlane.xlu0 %1113
      %1115 = vadd.xlane.f32.xlu0 %v1094
      %v1116 = vpop.xlane.xlu0 %1115
      %1117 = vadd.xlane.f32.xlu0 %v1095
      %v1118 = vpop.xlane.xlu0 %1117
      %1119 = vadd.xlane.f32.xlu0 %v1096
      %v1120 = vpop.xlane.xlu0 %1119
      %1121 = vadd.xlane.f32.xlu0 %v1097
      %v1122 = vpop.xlane.xlu0 %1121
      %1123 = vadd.xlane.f32.xlu0 %v1098
      %v1124 = vpop.xlane.xlu0 %1123
      %1125 = vadd.xlane.f32.xlu0 %v1099
      %v1126 = vpop.xlane.xlu0 %1125
      %1127 = vadd.xlane.f32.xlu0 %v1100
      %v1128 = vpop.xlane.xlu0 %1127
      %1129 = vadd.xlane.f32.xlu0 %v1101
      %v1130 = vpop.xlane.xlu0 %1129
      %1131 = vadd.xlane.f32.xlu0 %v1102
      %v1132 = vpop.xlane.xlu0 %1131
      %1133 = vadd.xlane.f32.xlu0 %v1103
      %v1134 = vpop.xlane.xlu0 %1133
      %1135 = vadd.xlane.f32.xlu0 %v1104
      %v1136 = vpop.xlane.xlu0 %1135
      %1137 = vadd.xlane.f32.xlu0 %v1105
      %v1138 = vpop.xlane.xlu0 %1137
      %1139 = vadd.xlane.f32.xlu0 %v1106
      %v1140 = vpop.xlane.xlu0 %1139
      %1141 = vadd.xlane.f32.xlu0 %v1107
      %v1142 = vpop.xlane.xlu0 %1141
      %1143 = vadd.xlane.f32.xlu0 %v1108
      %v1144 = vpop.xlane.xlu0 %1143
      %1145 = vadd.xlane.f32.xlu0 %v1109
      %v1146 = vpop.xlane.xlu0 %1145
      %1147 = vadd.xlane.f32.xlu0 %v1110
      %v1148 = vpop.xlane.xlu0 %1147
      %1149 = vadd.xlane.f32.xlu0 %v1111
      %v1150 = vpop.xlane.xlu0 %1149
      %1151 = vadd.xlane.f32.xlu0 %v1112
      %v1152 = vpop.xlane.xlu0 %1151
      %v1153 = vmul.f32 %v1114, %v550
      %v1154 = vmul.f32 %v1116, %v550
      %v1155 = vmul.f32 %v1118, %v550
      %v1156 = vmul.f32 %v1120, %v550
      %v1157 = vmul.f32 %v1122, %v550
      %v1158 = vmul.f32 %v1124, %v550
      %v1159 = vmul.f32 %v1126, %v550
      %v1160 = vmul.f32 %v1128, %v550
      %v1161 = vmul.f32 %v1130, %v550
      %v1162 = vmul.f32 %v1132, %v550
      %v1163 = vmul.f32 %v1134, %v550
      %v1164 = vmul.f32 %v1136, %v550
      %v1165 = vmul.f32 %v1138, %v550
      %v1166 = vmul.f32 %v1140, %v550
      %v1167 = vmul.f32 %v1142, %v550
      %v1168 = vmul.f32 %v1144, %v550
      %v1169 = vmul.f32 %v1146, %v550
      %v1170 = vmul.f32 %v1148, %v550
      %v1171 = vmul.f32 %v1150, %v550
      %v1172 = vmul.f32 %v1152, %v550
      %v1173 = vmul.f32 %v1073, %v1073
      %v1174 = vmul.f32 %v1074, %v1074
      %v1175 = vmul.f32 %v1075, %v1075
      %v1176 = vmul.f32 %v1076, %v1076
      %v1177 = vmul.f32 %v1077, %v1077
      %v1178 = vmul.f32 %v1078, %v1078
      %v1179 = vmul.f32 %v1079, %v1079
      %v1180 = vmul.f32 %v1080, %v1080
      %v1181 = vmul.f32 %v1081, %v1081
      %v1182 = vmul.f32 %v1082, %v1082
      %v1183 = vmul.f32 %v1083, %v1083
      %v1184 = vmul.f32 %v1084, %v1084
      %v1185 = vmul.f32 %v1085, %v1085
      %v1186 = vmul.f32 %v1086, %v1086
      %v1187 = vmul.f32 %v1087, %v1087
      %v1188 = vmul.f32 %v1088, %v1088
      %v1189 = vmul.f32 %v1089, %v1089
      %v1190 = vmul.f32 %v1090, %v1090
      %v1191 = vmul.f32 %v1091, %v1091
      %v1192 = vmul.f32 %v1092, %v1092
      %v1193 = vsub.f32 %v1153, %v1173
      %v1194 = vsub.f32 %v1154, %v1174
      %v1195 = vsub.f32 %v1155, %v1175
      %v1196 = vsub.f32 %v1156, %v1176
      %v1197 = vsub.f32 %v1157, %v1177
      %v1198 = vsub.f32 %v1158, %v1178
      %v1199 = vsub.f32 %v1159, %v1179
      %v1200 = vsub.f32 %v1160, %v1180
      %v1201 = vsub.f32 %v1161, %v1181
      %v1202 = vsub.f32 %v1162, %v1182
      %v1203 = vsub.f32 %v1163, %v1183
      %v1204 = vsub.f32 %v1164, %v1184
      %v1205 = vsub.f32 %v1165, %v1185
      %v1206 = vsub.f32 %v1166, %v1186
      %v1207 = vsub.f32 %v1167, %v1187
      %v1208 = vsub.f32 %v1168, %v1188
      %v1209 = vsub.f32 %v1169, %v1189
      %v1210 = vsub.f32 %v1170, %v1190
      %v1211 = vsub.f32 %v1171, %v1191
      %v1212 = vsub.f32 %v1172, %v1192
      %v1213 = vsub.f32 %v955, %v1073
      %v1214 = vsub.f32 %v958, %v1074
      %v1215 = vsub.f32 %v963, %v1075
      %v1216 = vsub.f32 %v966, %v1076
      %v1217 = vsub.f32 %v971, %v1077
      %v1218 = vsub.f32 %v974, %v1078
      %v1219 = vsub.f32 %v979, %v1079
      %v1220 = vsub.f32 %v982, %v1080
      %v1221 = vsub.f32 %v987, %v1081
      %v1222 = vsub.f32 %v990, %v1082
      %v1223 = vsub.f32 %v995, %v1083
      %v1224 = vsub.f32 %v998, %v1084
      %v1225 = vsub.f32 %v1003, %v1085
      %v1226 = vsub.f32 %v1006, %v1086
      %v1227 = vsub.f32 %v1011, %v1087
      %v1228 = vsub.f32 %v1014, %v1088
      %v1229 = vsub.f32 %v1019, %v1089
      %v1230 = vsub.f32 %v1022, %v1090
      %v1231 = vsub.f32 %v1027, %v1091
      %v1232 = vsub.f32 %v1030, %v1092
      %v1233 = vadd.f32 %v1193, 1e-05
      %v1234 = vadd.f32 %v1194, 1e-05
      %v1235 = vadd.f32 %v1195, 1e-05
      %v1236 = vadd.f32 %v1196, 1e-05
      %v1237 = vadd.f32 %v1197, 1e-05
      %v1238 = vadd.f32 %v1198, 1e-05
      %v1239 = vadd.f32 %v1199, 1e-05
      %v1240 = vadd.f32 %v1200, 1e-05
      %v1241 = vadd.f32 %v1201, 1e-05
      %v1242 = vadd.f32 %v1202, 1e-05
      %v1243 = vadd.f32 %v1203, 1e-05
      %v1244 = vadd.f32 %v1204, 1e-05
      %v1245 = vadd.f32 %v1205, 1e-05
      %v1246 = vadd.f32 %v1206, 1e-05
      %v1247 = vadd.f32 %v1207, 1e-05
      %v1248 = vadd.f32 %v1208, 1e-05
      %v1249 = vadd.f32 %v1209, 1e-05
      %v1250 = vadd.f32 %v1210, 1e-05
      %v1251 = vadd.f32 %v1211, 1e-05
      %v1252 = vadd.f32 %v1212, 1e-05
      %v1253 = vrsqrt.pop %v1233
      %v1254 = vrsqrt.pop %v1234
      %v1255 = vrsqrt.pop %v1235
      %v1256 = vrsqrt.pop %v1236
      %v1257 = vrsqrt.pop %v1237
      %v1258 = vrsqrt.pop %v1238
      %v1259 = vrsqrt.pop %v1239
      %v1260 = vrsqrt.pop %v1240
      %v1261 = vrsqrt.pop %v1241
      %v1262 = vrsqrt.pop %v1242
      %v1263 = vrsqrt.pop %v1243
      %v1264 = vrsqrt.pop %v1244
      %v1265 = vrsqrt.pop %v1245
      %v1266 = vrsqrt.pop %v1246
      %v1267 = vrsqrt.pop %v1247
      %v1268 = vrsqrt.pop %v1248
      %v1269 = vrsqrt.pop %v1249
      %v1270 = vrsqrt.pop %v1250
      %v1271 = vrsqrt.pop %v1251
      %v1272 = vrsqrt.pop %v1252
      %v1273 = vmul.f32 %v1213, %v1253
      %v1274 = vmul.f32 %v1214, %v1254
      %v1275 = vmul.f32 %v1215, %v1255
      %v1276 = vmul.f32 %v1216, %v1256
      %v1277 = vmul.f32 %v1217, %v1257
      %v1278 = vmul.f32 %v1218, %v1258
      %v1279 = vmul.f32 %v1219, %v1259
      %v1280 = vmul.f32 %v1220, %v1260
      %v1281 = vmul.f32 %v1221, %v1261
      %v1282 = vmul.f32 %v1222, %v1262
      %v1283 = vmul.f32 %v1223, %v1263
      %v1284 = vmul.f32 %v1224, %v1264
      %v1285 = vmul.f32 %v1225, %v1265
      %v1286 = vmul.f32 %v1226, %v1266
      %v1287 = vmul.f32 %v1227, %v1267
      %v1288 = vmul.f32 %v1228, %v1268
      %v1289 = vmul.f32 %v1229, %v1269
      %v1290 = vmul.f32 %v1230, %v1270
      %v1291 = vmul.f32 %v1231, %v1271
      %v1292 = vmul.f32 %v1232, %v1272
      %v1293 = vld [vmem:[%s4 + $0x1] sm:$0x1]
      %v1294 = vlaneseq
      %v1295 = vshrl.u32 %v1294, 7
      %v1296 = vsub.s32 0, %v1295
      %v1297 = vrot.slane %v1293, %v1296
      %v1298 = vmul.f32 %v1273, %v1297
      %v1299 = vmul.f32 %v1274, %v1297
      %v1300 = vmul.f32 %v1275, %v1297
      %v1301 = vmul.f32 %v1276, %v1297
      %v1302 = vmul.f32 %v1277, %v1297
      %v1303 = vmul.f32 %v1278, %v1297
      %v1304 = vmul.f32 %v1279, %v1297
      %v1305 = vmul.f32 %v1280, %v1297
      %v1306 = vmul.f32 %v1281, %v1297
      %v1307 = vmul.f32 %v1282, %v1297
      %v1308 = vmul.f32 %v1283, %v1297
      %v1309 = vmul.f32 %v1284, %v1297
      %v1310 = vmul.f32 %v1285, %v1297
      %v1311 = vmul.f32 %v1286, %v1297
      %v1312 = vmul.f32 %v1287, %v1297
      %v1313 = vmul.f32 %v1288, %v1297
      %v1314 = vmul.f32 %v1289, %v1297
      %v1315 = vmul.f32 %v1290, %v1297
      %v1316 = vmul.f32 %v1291, %v1297
      %v1317 = vmul.f32 %v1292, %v1297
      %v1318 = vld [vmem:[%s4 + $0x2] sm:$0x1]
      %v1319 = vlaneseq
      %v1320 = vshrl.u32 %v1319, 7
      %v1321 = vsub.s32 0, %v1320
      %v1322 = vrot.slane %v1318, %v1321
      %v1323 = vadd.f32 %v1298, %v1322
      %v1324 = vadd.f32 %v1299, %v1322
      %v1325 = vadd.f32 %v1300, %v1322
      %v1326 = vadd.f32 %v1301, %v1322
      %v1327 = vadd.f32 %v1302, %v1322
      %v1328 = vadd.f32 %v1303, %v1322
      %v1329 = vadd.f32 %v1304, %v1322
      %v1330 = vadd.f32 %v1305, %v1322
      %v1331 = vadd.f32 %v1306, %v1322
      %v1332 = vadd.f32 %v1307, %v1322
      %v1333 = vadd.f32 %v1308, %v1322
      %v1334 = vadd.f32 %v1309, %v1322
      %v1335 = vadd.f32 %v1310, %v1322
      %v1336 = vadd.f32 %v1311, %v1322
      %v1337 = vadd.f32 %v1312, %v1322
      %v1338 = vadd.f32 %v1313, %v1322
      %v1339 = vadd.f32 %v1314, %v1322
      %v1340 = vadd.f32 %v1315, %v1322
      %v1341 = vadd.f32 %v1316, %v1322
      %v1342 = vadd.f32 %v1317, %v1322
      %v1343 = vmax.f32 %v1323, 0.0
      %v1344 = vmax.f32 %v1324, 0.0
      %v1345 = vmax.f32 %v1325, 0.0
      %v1346 = vmax.f32 %v1326, 0.0
      %v1347 = vmax.f32 %v1327, 0.0
      %v1348 = vmax.f32 %v1328, 0.0
      %v1349 = vmax.f32 %v1329, 0.0
      %v1350 = vmax.f32 %v1330, 0.0
      %v1351 = vmax.f32 %v1331, 0.0
      %v1352 = vmax.f32 %v1332, 0.0
      %v1353 = vmax.f32 %v1333, 0.0
      %v1354 = vmax.f32 %v1334, 0.0
      %v1355 = vmax.f32 %v1335, 0.0
      %v1356 = vmax.f32 %v1336, 0.0
      %v1357 = vmax.f32 %v1337, 0.0
      %v1358 = vmax.f32 %v1338, 0.0
      %v1359 = vmax.f32 %v1339, 0.0
      %v1360 = vmax.f32 %v1340, 0.0
      %v1361 = vmax.f32 %v1341, 0.0
      %v1362 = vmax.f32 %v1342, 0.0
      %v1363 = vpack.c.bf16 %v1344, %v1343
      %v1364 = vpack.c.bf16 %v1346, %v1345
      %v1365 = vpack.c.bf16 %v1348, %v1347
      %v1366 = vpack.c.bf16 %v1350, %v1349
      %v1367 = vpack.c.bf16 %v1352, %v1351
      %v1368 = vpack.c.bf16 %v1354, %v1353
      %v1369 = vpack.c.bf16 %v1356, %v1355
      %v1370 = vpack.c.bf16 %v1358, %v1357
      %v1371 = vpack.c.bf16 %v1360, %v1359
      %v1372 = vpack.c.bf16 %v1362, %v1361
      %v1373 = vld [vmem:[%s5] sm:$0xf]
      %v1374 = vld [vmem:[%s5 + $0x4] sm:$0xf]
      %v1375 = vld [vmem:[%s5 + $0x8] sm:$0xf]
      %v1376 = vld [vmem:[%s5 + $0xc] sm:$0xf]
      %v1377 = vld [vmem:[%s5 + $0x10] sm:$0xf]
      %v1378 = vld [vmem:[%s5 + $0x14] sm:$0xf]
      %v1379 = vld [vmem:[%s5 + $0x18] sm:$0xf]
      %v1380 = vld [vmem:[%s5 + $0x1c] sm:$0xf]
      %v1381 = vld [vmem:[%s5 + $0x20] sm:$0xf]
      %v1382 = vld [vmem:[%s5 + $0x24] sm:$0xf]
      %v1383 = vld [vmem:[%s5 + $0x28] sm:$0xf]
      %v1384 = vld [vmem:[%s5 + $0x2c] sm:$0xf]
      %v1385 = vld [vmem:[%s5 + $0x30] sm:$0xf]
      %v1386 = vld [vmem:[%s5 + $0x34] sm:$0xf]
      %v1387 = vld [vmem:[%s5 + $0x38] sm:$0xf]
      %v1388 = vld [vmem:[%s5 + $0x3c] sm:$0xf]
      %v1389 = vld [vmem:[%s6] sm:$0x1]
      %v1391 = vlaneseq
      %v1392 = vshrl.u32 %v1391, 7
      %v1393 = vsub.s32 0, %v1392
      %v1394 = vrot.slane %v1389, %v1393
      %v1412 = vunpack.c.l.b16 %v1373
      %v1413 = vunpack.c.l.b16 %v1374
      %v1414 = vunpack.c.l.b16 %v1375
      %v1415 = vunpack.c.l.b16 %v1376
      %v1416 = vunpack.c.l.b16 %v1377
      %v1417 = vunpack.c.l.b16 %v1378
      %v1418 = vunpack.c.l.b16 %v1379
      %v1419 = vunpack.c.l.b16 %v1380
      %v1420 = vunpack.c.l.b16 %v1381
      %v1421 = vunpack.c.l.b16 %v1382
      %v1422 = vunpack.c.l.b16 %v1383
      %v1423 = vunpack.c.l.b16 %v1384
      %v1424 = vunpack.c.l.b16 %v1385
      %v1425 = vunpack.c.l.b16 %v1386
      %v1426 = vunpack.c.l.b16 %v1387
      %v1427 = vunpack.c.l.b16 %v1388
      %v1428 = vpack.c.b16 %v1413, %v1412
      %v1429 = vpack.c.b16 %v1415, %v1414
      %v1430 = vpack.c.b16 %v1417, %v1416
      %v1431 = vpack.c.b16 %v1419, %v1418
      %v1432 = vpack.c.b16 %v1421, %v1420
      %v1433 = vpack.c.b16 %v1423, %v1422
      %v1434 = vpack.c.b16 %v1425, %v1424
      %v1435 = vpack.c.b16 %v1427, %v1426
      %1444 = vmatprep.subr.bf16.mxu0 0
      %1445 = vmatpush1.bf16.msra.mxu0 %v1435
      %1446 = vmatprep.subr.bf16.mxu0 0
      %1447 = vmatpush1.bf16.msra.mxu0 %v1434
      %1448 = vmatprep.subr.bf16.mxu0 0
      %1449 = vmatpush1.bf16.msra.mxu0 %v1433
      %1450 = vmatprep.subr.bf16.mxu0 0
      %1451 = vmatpush1.bf16.msra.mxu0 %v1432
      %1452 = vmatprep.subr.bf16.mxu0 0
      %1453 = vmatpush1.bf16.msra.mxu0 %v1431
      %1454 = vmatprep.subr.bf16.mxu0 0
      %1455 = vmatpush1.bf16.msra.mxu0 %v1430
      %1456 = vmatprep.subr.bf16.mxu0 0
      %1457 = vmatpush1.bf16.msra.mxu0 %v1429
      %1458 = vmatprep.subr.bf16.mxu0 0
      %1459 = vmatpush1.bf16.msra.mxu0 %v1428
      %1460 = vmatprep.subr.bf16.mxu0 0
      %1461 = vmatpush2.bf16.msra.mxu0 0
      %1462 = vmatprep.subr.bf16.mxu0 0
      %1463 = vmatpush2.bf16.msra.mxu0 0
      %1464 = vmatprep.subr.bf16.mxu0 0
      %1465 = vmatpush2.bf16.msra.mxu0 0
      %1466 = vmatprep.subr.bf16.mxu0 0
      %1467 = vmatpush2.bf16.msra.mxu0 0
      %1468 = vmatprep.subr.bf16.mxu0 0
      %1469 = vmatpush2.bf16.msra.mxu0 0
      %1470 = vmatprep.subr.bf16.mxu0 0
      %1471 = vmatpush2.bf16.msra.mxu0 0
      %1472 = vmatprep.subr.bf16.mxu0 0
      %1473 = vmatpush2.bf16.msra.mxu0 0
      %1474 = vmatprep.subr.bf16.mxu0 0
      %1475 = vmatpush2.bf16.msra.mxu0 0
      %1476 = vmatprep.mubr.bf16.mxu0 0
      %1477 = vmatmul.mubr.bf16.gmra.mxu0 %v1363
      %v1478 = vpop.f32.mrf.mxu0
      %v1479 = vadd.f32 %v1394, %v1478
      %v1480 = vpop.f32.mrf.mxu0
      %v1481 = vpop.f32.mrf.mxu0
      %v1482 = vadd.f32 %v1394, %v1481
      %v1483 = vpop.f32.mrf.mxu0
      %1484 = vmatprep.mubr.bf16.mxu0 0
      %1485 = vmatmul.mubr.bf16.gmra.mxu0 %v1364
      %v1486 = vpop.f32.mrf.mxu0
      %v1487 = vadd.f32 %v1394, %v1486
      %v1488 = vpop.f32.mrf.mxu0
      %v1489 = vpop.f32.mrf.mxu0
      %v1490 = vadd.f32 %v1394, %v1489
      %v1491 = vpop.f32.mrf.mxu0
      %1492 = vmatprep.mubr.bf16.mxu0 0
      %1493 = vmatmul.mubr.bf16.gmra.mxu0 %v1365
      %v1494 = vpop.f32.mrf.mxu0
      %v1495 = vadd.f32 %v1394, %v1494
      %v1496 = vpop.f32.mrf.mxu0
      %v1497 = vpop.f32.mrf.mxu0
      %v1498 = vadd.f32 %v1394, %v1497
      %v1499 = vpop.f32.mrf.mxu0
      %1500 = vmatprep.mubr.bf16.mxu0 0
      %1501 = vmatmul.mubr.bf16.gmra.mxu0 %v1366
      %v1502 = vpop.f32.mrf.mxu0
      %v1503 = vadd.f32 %v1394, %v1502
      %v1504 = vpop.f32.mrf.mxu0
      %v1505 = vpop.f32.mrf.mxu0
      %v1506 = vadd.f32 %v1394, %v1505
      %v1507 = vpop.f32.mrf.mxu0
      %1508 = vmatprep.mubr.bf16.mxu0 0
      %1509 = vmatmul.mubr.bf16.gmra.mxu0 %v1367
      %v1510 = vpop.f32.mrf.mxu0
      %v1511 = vadd.f32 %v1394, %v1510
      %v1512 = vpop.f32.mrf.mxu0
      %v1513 = vpop.f32.mrf.mxu0
      %v1514 = vadd.f32 %v1394, %v1513
      %v1515 = vpop.f32.mrf.mxu0
      %1516 = vmatprep.mubr.bf16.mxu0 0
      %1517 = vmatmul.mubr.bf16.gmra.mxu0 %v1368
      %v1518 = vpop.f32.mrf.mxu0
      %v1519 = vadd.f32 %v1394, %v1518
      %v1520 = vpop.f32.mrf.mxu0
      %v1521 = vpop.f32.mrf.mxu0
      %v1522 = vadd.f32 %v1394, %v1521
      %v1523 = vpop.f32.mrf.mxu0
      %1524 = vmatprep.mubr.bf16.mxu0 0
      %1525 = vmatmul.mubr.bf16.gmra.mxu0 %v1369
      %v1526 = vpop.f32.mrf.mxu0
      %v1527 = vadd.f32 %v1394, %v1526
      %v1528 = vpop.f32.mrf.mxu0
      %v1529 = vpop.f32.mrf.mxu0
      %v1530 = vadd.f32 %v1394, %v1529
      %v1531 = vpop.f32.mrf.mxu0
      %1532 = vmatprep.mubr.bf16.mxu0 0
      %1533 = vmatmul.mubr.bf16.gmra.mxu0 %v1370
      %v1534 = vpop.f32.mrf.mxu0
      %v1535 = vadd.f32 %v1394, %v1534
      %v1536 = vpop.f32.mrf.mxu0
      %v1537 = vpop.f32.mrf.mxu0
      %v1538 = vadd.f32 %v1394, %v1537
      %v1539 = vpop.f32.mrf.mxu0
      %1540 = vmatprep.mubr.bf16.mxu0 0
      %1541 = vmatmul.mubr.bf16.gmra.mxu0 %v1371
      %v1542 = vpop.f32.mrf.mxu0
      %v1543 = vadd.f32 %v1394, %v1542
      %v1544 = vpop.f32.mrf.mxu0
      %v1545 = vpop.f32.mrf.mxu0
      %v1546 = vadd.f32 %v1394, %v1545
      %v1547 = vpop.f32.mrf.mxu0
      %1548 = vmatprep.mubr.bf16.mxu0 0
      %1549 = vmatmul.mubr.bf16.gmra.mxu0 %v1372
      %v1550 = vpop.f32.mrf.mxu0
      %v1551 = vadd.f32 %v1394, %v1550
      %v1552 = vpop.f32.mrf.mxu0
      %v1553 = vpop.f32.mrf.mxu0
      %v1554 = vadd.f32 %v1394, %v1553
      %v1555 = vpop.f32.mrf.mxu0
      %1556 = vdwg.mxu0
      %v1557 = vtanh.pop %v1479
      %v1558 = vtanh.pop %v1482
      %v1559 = vtanh.pop %v1487
      %v1560 = vtanh.pop %v1490
      %v1561 = vtanh.pop %v1495
      %v1562 = vtanh.pop %v1498
      %v1563 = vtanh.pop %v1503
      %v1564 = vtanh.pop %v1506
      %v1565 = vtanh.pop %v1511
      %v1566 = vtanh.pop %v1514
      %v1567 = vtanh.pop %v1519
      %v1568 = vtanh.pop %v1522
      %v1569 = vtanh.pop %v1527
      %v1570 = vtanh.pop %v1530
      %v1571 = vtanh.pop %v1535
      %v1572 = vtanh.pop %v1538
      %v1573 = vtanh.pop %v1543
      %v1574 = vtanh.pop %v1546
      %v1575 = vtanh.pop %v1551
      %v1576 = vtanh.pop %v1554
      %vm1577 = vcmask 31744
      %1578 = vst.msk [vmem:[%s280] sm:$0xff] %vm1577, %v1557
      %1579 = vst.msk [vmem:[%s280 + $0x8] sm:$0xff] %vm1577, %v1558
      %1580 = vst.msk [vmem:[%s280 + $0x10] sm:$0xff] %vm1577, %v1559
      %1581 = vst.msk [vmem:[%s280 + $0x18] sm:$0xff] %vm1577, %v1560
      %1582 = vst.msk [vmem:[%s280 + $0x20] sm:$0xff] %vm1577, %v1561
      %1583 = vst.msk [vmem:[%s280 + $0x28] sm:$0xff] %vm1577, %v1562
      %1584 = vst.msk [vmem:[%s280 + $0x30] sm:$0xff] %vm1577, %v1563
      %1585 = vst.msk [vmem:[%s280 + $0x38] sm:$0xff] %vm1577, %v1564
      %1586 = vst.msk [vmem:[%s280 + $0x40] sm:$0xff] %vm1577, %v1565
      %1587 = vst.msk [vmem:[%s280 + $0x48] sm:$0xff] %vm1577, %v1566
      %1588 = vst.msk [vmem:[%s280 + $0x50] sm:$0xff] %vm1577, %v1567
      %1589 = vst.msk [vmem:[%s280 + $0x58] sm:$0xff] %vm1577, %v1568
      %1590 = vst.msk [vmem:[%s280 + $0x60] sm:$0xff] %vm1577, %v1569
      %1591 = vst.msk [vmem:[%s280 + $0x68] sm:$0xff] %vm1577, %v1570
      %1592 = vst.msk [vmem:[%s280 + $0x70] sm:$0xff] %vm1577, %v1571
      %1593 = vst.msk [vmem:[%s280 + $0x78] sm:$0xff] %vm1577, %v1572
      %1594 = vst.msk [vmem:[%s280 + $0x80] sm:$0xff] %vm1577, %v1573
      %1595 = vst.msk [vmem:[%s280 + $0x88] sm:$0xff] %vm1577, %v1574
      %1596 = vst.msk [vmem:[%s280 + $0x90] sm:$0xff] %vm1577, %v1575
      %1597 = vst.msk [vmem:[%s280 + $0x98] sm:$0xff] %vm1577, %v1576
      %s1598 = smul.u32 20, %s18
      %p1599 = scmp.lt.s32.totalorder %s1598, 39
      %s1600 = scalar_select %p1599, %s1598, 39
      %s1601 = smul.addr %s1600, 8
      %s1602 = scalar_lea.vmem %s7, %s1601
      // Predicated region
      $region49: #{feed_forward_actor.1} parent=47 // pred_check
        %p1603 = pneg %p188
      $region50: #{feed_forward_actor.1} parent=47 // pred_check_branch
        %1605 = sbr.rel (%p1603) target = $region52
      $region51: #{feed_forward_actor.1} parent=47 // pred_region
        %s1606 = smul.u32 20, %s18
      $region52: #{feed_forward_actor.1} parent=47 // pred_fallthru
        _
    $region48: #{feed_forward_actor.1} parent=5 // pred_fallthru
      _
    %p1607 = scmp.le.s32.totalorder 2, %s13
    // Predicated region
    $region53: #{feed_forward_actor.1} parent=5 // pred_check
      %p1608 = pneg %p1607
    $region54: #{feed_forward_actor.1} parent=5 // pred_check_branch
      %1610 = sbr.rel (%p1608) target = $region56
    $region55: #{feed_forward_actor.1} parent=5 // pred_region
      %s1611 = ssub.s32 %s13, 2
      // Predicated region
      $region57: #{feed_forward_actor.1} parent=55 // pred_check
        %p1612 = pneg %p194
      $region58: #{feed_forward_actor.1} parent=55 // pred_check_branch
        %1614 = sbr.rel (%p1612) target = $region60
      $region59: #{feed_forward_actor.1} parent=55 // pred_region
        %s1615 = smul.u32 20, %s19
        %p1616 = scmp.lt.s32.totalorder %s1615, 39
        %s1617 = scalar_select %p1616, %s1615, 39
        %s1618 = smul.addr %s1617, 8
        %s1619 = scalar_lea.vmem %s7, %s1618
      $region60: #{feed_forward_actor.1} parent=55 // pred_fallthru
        _
    $region56: #{feed_forward_actor.1} parent=5 // pred_fallthru
      _
  $region6: #{feed_forward_actor.1} parent=0 // loop_footer
    %s17 = sadd.s32 1, %s13
  $region7: #{feed_forward_actor.1} parent=0 // loop_footer_branch
    %12 = sbr.rel target = $region3
  $region8: #{feed_forward_actor.1} parent=0 // loop_exit
    _

</llo_original>
